<compile_context>
chip_gen: v7x
topology: tpu7x:2x2x1
jax: 0.10.0
libtpu: 0.0.40
codegen_flags: <defaults>
</compile_context>

<pallas_src>
import math
import functools

import jax
import jax.numpy as jnp
from jax.experimental import pallas as pl
from jax.experimental.pallas import tpu as pltpu


# -----------------------------------------------------------------------------
# Fused kernel: LSTM recurrence (unrolled) + normalized Bahdanau attention.
# -----------------------------------------------------------------------------
def _fused_kernel(xp_ref, h0_ref, c0_ref, whh_ref, keys_ref, kmask_ref,
                  wq_ref, wk_ref, nbias_ref, la_ref,
                  y_ref, hn_ref, cn_ref, ctx_ref, scores_ref):
    T, B, _ = xp_ref.shape                     # static shapes
    H = h0_ref.shape[-1]
    _, Tk, C = keys_ref.shape
    CP = ctx_ref.shape[-1]                     # lane-padded context width
    TKP = scores_ref.shape[-1]                 # lane-padded key-length width

    # ------------------------- phase 1: LSTM --------------------------------
    # x @ W_ih + b is precomputed (xp_ref); only h @ W_hh is on the serial path.
    # NOTE: at M=B=2 the per-step MXU dot is latency- not throughput-bound; a
    # VPU broadcast-MAC alternative is worth a bundle-level measurement.
    whh = whh_ref[...]                         # (H, 4H)
    h = h0_ref[...]                            # (B, H)
    c = c0_ref[...]                            # (B, H)
    for t in range(T):                         # fully unrolled: T is tiny/static
        # (for large T: lax.fori_loop(..., unroll=k) with pl.ds reads/writes)
        gates = xp_ref[t] + jnp.dot(h, whh, preferred_element_type=jnp.float32)
        sig = jax.nn.sigmoid(gates)            # one full-tile EUP pass
        tah = jnp.tanh(gates)                  # one full-tile EUP pass
        c = sig[:, H:2 * H] * c + sig[:, 0:H] * tah[:, 2 * H:3 * H]
        h = sig[:, 3 * H:4 * H] * jnp.tanh(c)
        y_ref[t] = h
    hn_ref[...] = h                            # written once, after last step
    cn_ref[...] = c

    # --------------------- phase 2: Bahdanau attention ----------------------
    # Vectorized over the whole batch: two large projections + batched epilogue.
    h_all = y_ref[...]                                      # (T,B,H) VMEM readback
    pq = jnp.dot(h_all.reshape(T * B, H), wq_ref[...],
                 preferred_element_type=jnp.float32)        # (T*B, C)
    keys = keys_ref[...]                                    # (B, Tk, C)
    pk = jnp.dot(keys.reshape(B * Tk, C), wk_ref[...],
                 preferred_element_type=jnp.float32).reshape(B, Tk, C)

    s = jnp.tanh(pq.reshape(T * B, 1, C)
                 + jnp.tile(pk, (T, 1, 1))                  # row t*B+b uses pk[b]
                 + nbias_ref[...].reshape(1, 1, C))         # (T*B, Tk, C)
    sc = jnp.sum(s * la_ref[...].reshape(1, 1, C), axis=-1)  # (T*B, Tk)
    sc = sc.reshape(T, B, Tk)

    # mask padded keys (1.0 = valid): sentinel -65504.0 acts as -inf; a fully
    # masked row degrades to uniform softmax, matching the reference.
    valid = jnp.broadcast_to(kmask_ref[...].reshape(1, B, Tk), (T, B, Tk)) > 0.5
    sc = jnp.where(valid, sc, jnp.float32(-65504.0))

    # softmax over keys (exact reciprocal preserves the 1e-5 check)
    m = jnp.max(sc, axis=-1, keepdims=True)
    e = jnp.exp(sc - m)
    p = e * pl.reciprocal(jnp.sum(e, axis=-1, keepdims=True), approx=False)  # (T,B,Tk)

    # per-batch context: ctx[t,b,:] = p[t,b,:] @ keys[b]
    ctx_btc = jnp.einsum("btk,bkc->btc", jnp.transpose(p, (1, 0, 2)), keys,
                         preferred_element_type=jnp.float32)  # (B,T,C)
    ctx = jnp.transpose(ctx_btc, (1, 0, 2))                   # (T,B,C)

    # lane-dense stores: outputs are padded to 128 lanes; wrapper slices valid part
    if TKP > Tk:
        p = jnp.concatenate(
            [p, jnp.zeros((T, B, TKP - Tk), jnp.float32)], axis=-1)
    scores_ref[...] = p
    if CP > C:
        ctx = jnp.concatenate(
            [ctx, jnp.zeros((T, B, CP - C), jnp.float32)], axis=-1)
    ctx_ref[...] = ctx


def _round_up(x, m):
    return ((x + m - 1) // m) * m


# -----------------------------------------------------------------------------
# RecurrentAttention forward (thin wrapper: hoisted x-projection + layout glue).
# -----------------------------------------------------------------------------
def recurrent_attention_forward(params, inputs, hidden, context, context_len):
    h0, c0 = hidden                                   # (1, B, H) each
    T, B, _ = inputs.shape
    H = h0.shape[-1]
    Tk, _, C = context.shape
    f32 = jnp.float32
    CP = _round_up(C, 128)                            # lane-padded output widths
    TKP = _round_up(Tk, 128)

    # hoisted input projection + fused bias: one large MXU matmul, off the serial path
    bias = (params["b_ih"] + params["b_hh"]).astype(f32)
    xp = jnp.einsum("tbi,gi->tbg", inputs.astype(f32),
                    params["w_ih"].astype(f32)) + bias            # (T, B, 4H)

    whh_t = params["w_hh"].T.astype(f32)                          # (H, 4H)
    wq_t = params["w_q"].T.astype(f32)                            # (H, C)
    wk_t = params["w_k"].T.astype(f32)                            # (C, C)
    nbias = params["norm_bias"].reshape(1, C).astype(f32)
    la = params["linear_att"].astype(f32)
    la = (la / jnp.linalg.norm(la) * params["norm_scalar"]).reshape(1, C)
    keys_bf = jnp.transpose(context, (1, 0, 2)).astype(f32)       # (B, Tk, C)
    # key-validity mask (length-only transform, same role as PyTorch set_mask)
    kmask = (jnp.arange(Tk)[None, :] < context_len[:, None]).astype(f32)  # (B, Tk)

    out_shapes = (
        jax.ShapeDtypeStruct((T, B, H), f32),       # rnn outputs (seq-first)
        jax.ShapeDtypeStruct((B, H), f32),          # h_n
        jax.ShapeDtypeStruct((B, H), f32),          # c_n
        jax.ShapeDtypeStruct((T, B, CP), f32),      # attn context (lane-padded)
        jax.ShapeDtypeStruct((T, B, TKP), f32),     # attn scores  (lane-padded)
    )

    grid_spec = pltpu.PrefetchScalarGridSpec(
        num_scalar_prefetch=0,
        grid=(1,),                                  # single launch; loops in-kernel
        in_specs=[
            pl.BlockSpec((T, B, 4 * H), lambda i: (0, 0, 0)),
            pl.BlockSpec((B, H), lambda i: (0, 0)),
            pl.BlockSpec((B, H), lambda i: (0, 0)),
            pl.BlockSpec((H, 4 * H), lambda i: (0, 0)),
            pl.BlockSpec((B, Tk, C), lambda i: (0, 0, 0)),
            pl.BlockSpec((B, Tk), lambda i: (0, 0)),
            pl.BlockSpec((H, C), lambda i: (0, 0)),
            pl.BlockSpec((C, C), lambda i: (0, 0)),
            pl.BlockSpec((1, C), lambda i: (0, 0)),
            pl.BlockSpec((1, C), lambda i: (0, 0)),
        ],
        out_specs=[
            pl.BlockSpec((T, B, H), lambda i: (0, 0, 0)),
            pl.BlockSpec((B, H), lambda i: (0, 0)),
            pl.BlockSpec((B, H), lambda i: (0, 0)),
            pl.BlockSpec((T, B, CP), lambda i: (0, 0, 0)),
            pl.BlockSpec((T, B, TKP), lambda i: (0, 0, 0)),
        ],
    )

    rnn_out, h_n, c_n, ctx_pad, scores_pad = pl.pallas_call(
        _fused_kernel,
        out_shape=out_shapes,
        grid_spec=grid_spec,
        compiler_params=pltpu.CompilerParams(
            dimension_semantics=("arbitrary",)),
    )(xp, h0[0].astype(f32), c0[0].astype(f32), whh_t, keys_bf, kmask,
      wq_t, wk_t, nbias, la)

    # dropout(p=0) -> identity in forward (module default dropout=0)
    attn_outputs = ctx_pad[:, :, :C]                  # (Tq, B, C)
    scores = scores_pad[:, :, :Tk]                    # (Tq, B, Tk)
    new_hidden = (h_n[None, :, :], c_n[None, :, :])
    return rnn_out, new_hidden, attn_outputs, scores


# -----------------------------------------------------------------------------
# Pure-JAX reference (same math) for a correctness check.
# -----------------------------------------------------------------------------
def _reference(params, inputs, hidden, context, context_len):
    h, c = hidden[0][0], hidden[1][0]
    w_ih, w_hh, b_ih, b_hh = (params["w_ih"], params["w_hh"],
                              params["b_ih"], params["b_hh"])

    def step(carry, x_t):
        h, c = carry
        gates = x_t @ w_ih.T + b_ih + h @ w_hh.T + b_hh
        i, f, g, o = jnp.split(gates, 4, axis=-1)
        i, f, o = jax.nn.sigmoid(i), jax.nn.sigmoid(f), jax.nn.sigmoid(o)
        g = jnp.tanh(g)
        c = f * c + i * g
        h = o * jnp.tanh(c)
        return (h, c), h

    (h_n, c_n), rnn_out = jax.lax.scan(step, (h, c), inputs)

    q = jnp.transpose(rnn_out, (1, 0, 2))             # (B, Tq, H)
    k = jnp.transpose(context, (1, 0, 2))              # (B, Tk, C)
    pq = q @ params["w_q"].T
    pk = k @ params["w_k"].T
    la = params["linear_att"]
    la = la / jnp.linalg.norm(la) * params["norm_scalar"]
    s = jnp.tanh(pq[:, :, None, :] + pk[:, None, :, :] + params["norm_bias"])
    scores = jnp.einsum("bqkc,c->bqk", s, la)
    Tk = k.shape[1]
    mask = jnp.arange(Tk)[None, :] >= context_len[:, None]
    scores = jnp.where(mask[:, None, :], -65504.0, scores)
    p = jax.nn.softmax(scores, axis=-1)
    ctx = jnp.einsum("bqk,bkc->bqc", p, k)
    return (rnn_out, (h_n[None], c_n[None]),
            jnp.transpose(ctx, (1, 0, 2)), jnp.transpose(p, (1, 0, 2)))


# -----------------------------------------------------------------------------
if __name__ == "__main__":
    # small shapes consistent with the module
    T_q, T_k, B = 6, 8, 2
    INPUT, HIDDEN, CONTEXT = 32, 32, 32

    key = jax.random.PRNGKey(0)
    ks = jax.random.split(key, 12)

    stdv_lstm = 1.0 / math.sqrt(HIDDEN)
    stdv_lin = 1.0 / math.sqrt(CONTEXT)
    u = functools.partial(jax.random.uniform, dtype=jnp.float32)

    params = {
        # nn.LSTM(input_size, hidden_size, 1, bias=True)
        "w_ih": u(ks[0], (4 * HIDDEN, INPUT), minval=-stdv_lstm, maxval=stdv_lstm),
        "w_hh": u(ks[1], (4 * HIDDEN, HIDDEN), minval=-stdv_lstm, maxval=stdv_lstm),
        "b_ih": u(ks[2], (4 * HIDDEN,), minval=-stdv_lstm, maxval=stdv_lstm),
        "b_hh": u(ks[3], (4 * HIDDEN,), minval=-stdv_lstm, maxval=stdv_lstm),
        # BahdanauAttention(hidden, context, context, normalize=True)
        "w_q": u(ks[4], (CONTEXT, HIDDEN), minval=-stdv_lin, maxval=stdv_lin),
        "w_k": u(ks[5], (CONTEXT, CONTEXT), minval=-stdv_lin, maxval=stdv_lin),
        "linear_att": u(ks[6], (CONTEXT,), minval=-stdv_lin, maxval=stdv_lin),
        "norm_scalar": jnp.float32(stdv_lin),             # reset_parameters: fill(stdv)
        "norm_bias": jnp.zeros((CONTEXT,), jnp.float32),  # reset_parameters: zero
    }

    inputs = jax.random.normal(ks[7], (T_q, B, INPUT), jnp.float32)
    h0 = jax.random.normal(ks[8], (1, B, HIDDEN), jnp.float32)
    c0 = jax.random.normal(ks[9], (1, B, HIDDEN), jnp.float32)
    context = jax.random.normal(ks[10], (T_k, B, CONTEXT), jnp.float32)
    context_len = jnp.array([T_k, 5], dtype=jnp.int32)

    forward = jax.jit(recurrent_attention_forward)
    rnn_out, hidden, attn_out, scores = forward(
        params, inputs, (h0, c0), context, context_len)
    jax.block_until_ready((rnn_out, hidden, attn_out, scores))

    # correctness check vs pure-JAX reference
    r_rnn, (r_h, r_c), r_attn, r_scores = _reference(
        params, inputs, (h0, c0), context, context_len)
    assert jnp.allclose(rnn_out, r_rnn, atol=1e-5, rtol=1e-5)
    assert jnp.allclose(hidden[0], r_h, atol=1e-5, rtol=1e-5)
    assert jnp.allclose(hidden[1], r_c, atol=1e-5, rtol=1e-5)
    assert jnp.allclose(attn_out, r_attn, atol=1e-5, rtol=1e-5)
    assert jnp.allclose(scores, r_scores, atol=1e-5, rtol=1e-5)

    print("KERNEL_OK")
</pallas_src>

<mosaic_0001>
module attributes {stable_mosaic.version = 11 : i64} {
  func.func @_fused_kernel(%arg0: i32, %arg1: memref<6x2x128xf32, #tpu.memory_space<vmem>>, %arg2: memref<2x32xf32, #tpu.memory_space<vmem>>, %arg3: memref<2x32xf32, #tpu.memory_space<vmem>>, %arg4: memref<32x128xf32, #tpu.memory_space<vmem>>, %arg5: memref<2x8x32xf32, #tpu.memory_space<vmem>>, %arg6: memref<2x8xf32, #tpu.memory_space<vmem>>, %arg7: memref<32x32xf32, #tpu.memory_space<vmem>>, %arg8: memref<32x32xf32, #tpu.memory_space<vmem>>, %arg9: memref<1x32xf32, #tpu.memory_space<vmem>>, %arg10: memref<1x32xf32, #tpu.memory_space<vmem>>, %arg11: memref<6x2x32xf32, #tpu.memory_space<vmem>>, %arg12: memref<2x32xf32, #tpu.memory_space<vmem>>, %arg13: memref<2x32xf32, #tpu.memory_space<vmem>>, %arg14: memref<6x2x128xf32, #tpu.memory_space<vmem>>, %arg15: memref<6x2x128xf32, #tpu.memory_space<vmem>>) attributes {dimension_semantics = [#tpu.dimension_semantics<arbitrary>], iteration_bounds = array<i64: 1>, scalar_prefetch = 0 : i64, scratch_operands = 0 : i64, tpu.core_type = #tpu.core_type<tc>, window_params = [{pipeline_mode = #tpu.pipeline_mode<synchronous>, transform_indices = @transform_0, window_bounds = array<i64: 6, 2, 128>}, {pipeline_mode = #tpu.pipeline_mode<synchronous>, transform_indices = @transform_1, window_bounds = array<i64: 2, 32>}, {pipeline_mode = #tpu.pipeline_mode<synchronous>, transform_indices = @transform_2, window_bounds = array<i64: 2, 32>}, {pipeline_mode = #tpu.pipeline_mode<synchronous>, transform_indices = @transform_3, window_bounds = array<i64: 32, 128>}, {pipeline_mode = #tpu.pipeline_mode<synchronous>, transform_indices = @transform_4, window_bounds = array<i64: 2, 8, 32>}, {pipeline_mode = #tpu.pipeline_mode<synchronous>, transform_indices = @transform_5, window_bounds = array<i64: 2, 8>}, {pipeline_mode = #tpu.pipeline_mode<synchronous>, transform_indices = @transform_6, window_bounds = array<i64: 32, 32>}, {pipeline_mode = #tpu.pipeline_mode<synchronous>, transform_indices = @transform_7, window_bounds = array<i64: 32, 32>}, {pipeline_mode = #tpu.pipeline_mode<synchronous>, transform_indices = @transform_8, window_bounds = array<i64: 1, 32>}, {pipeline_mode = #tpu.pipeline_mode<synchronous>, transform_indices = @transform_9, window_bounds = array<i64: 1, 32>}, {pipeline_mode = #tpu.pipeline_mode<synchronous>, transform_indices = @transform_10, window_bounds = array<i64: 6, 2, 32>}, {pipeline_mode = #tpu.pipeline_mode<synchronous>, transform_indices = @transform_11, window_bounds = array<i64: 2, 32>}, {pipeline_mode = #tpu.pipeline_mode<synchronous>, transform_indices = @transform_12, window_bounds = array<i64: 2, 32>}, {pipeline_mode = #tpu.pipeline_mode<synchronous>, transform_indices = @transform_13, window_bounds = array<i64: 6, 2, 128>}, {pipeline_mode = #tpu.pipeline_mode<synchronous>, transform_indices = @transform_14, window_bounds = array<i64: 6, 2, 128>}]} {
    %c0 = arith.constant 0 : index
    %c0_0 = arith.constant 0 : index
    %0 = vector.load %arg4[%c0, %c0_0] : memref<32x128xf32, #tpu.memory_space<vmem>>, vector<32x128xf32>
    %c0_1 = arith.constant 0 : index
    %c0_2 = arith.constant 0 : index
    %1 = vector.load %arg2[%c0_1, %c0_2] : memref<2x32xf32, #tpu.memory_space<vmem>>, vector<2x32xf32>
    %c0_3 = arith.constant 0 : index
    %c0_4 = arith.constant 0 : index
    %2 = vector.load %arg3[%c0_3, %c0_4] : memref<2x32xf32, #tpu.memory_space<vmem>>, vector<2x32xf32>
    %c0_5 = arith.constant 0 : index
    %c0_6 = arith.constant 0 : index
    %c0_7 = arith.constant 0 : index
    %3 = vector.load %arg1[%c0_5, %c0_6, %c0_7] : memref<6x2x128xf32, #tpu.memory_space<vmem>>, vector<1x2x128xf32>
    %4 = vector.shape_cast %3 : vector<1x2x128xf32> to vector<2x128xf32>
    %cst = arith.constant dense<0.000000e+00> : vector<2x128xf32>
    %5 = tpu.matmul %1, %0, %cst {dimension_numbers = #tpu.dot_dimension_numbers<[1], [0], [0], [1], [0, 0, 1, 1], [], []>} : vector<2x32xf32>, vector<32x128xf32>, vector<2x128xf32> -> vector<2x128xf32>
    %6 = arith.addf %4, %5 : vector<2x128xf32>
    %7 = arith.negf %6 : vector<2x128xf32>
    %8 = math.exp %7 : vector<2x128xf32>
    %cst_8 = arith.constant 1.000000e+00 : f32
    %9 = vector.broadcast %cst_8 : f32 to vector<2x128xf32>
    %10 = arith.addf %9, %8 : vector<2x128xf32>
    %11 = arith.divf %9, %10 : vector<2x128xf32>
    %12 = math.tanh %6 : vector<2x128xf32>
    %13 = vector.extract_strided_slice %11 {offsets = [0, 32], sizes = [2, 32], strides = [1, 1]} : vector<2x128xf32> to vector<2x32xf32>
    %14 = arith.mulf %13, %2 : vector<2x32xf32>
    %15 = vector.extract_strided_slice %11 {offsets = [0, 0], sizes = [2, 32], strides = [1, 1]} : vector<2x128xf32> to vector<2x32xf32>
    %16 = vector.extract_strided_slice %12 {offsets = [0, 64], sizes = [2, 32], strides = [1, 1]} : vector<2x128xf32> to vector<2x32xf32>
    %17 = arith.mulf %15, %16 : vector<2x32xf32>
    %18 = arith.addf %14, %17 : vector<2x32xf32>
    %19 = vector.extract_strided_slice %11 {offsets = [0, 96], sizes = [2, 32], strides = [1, 1]} : vector<2x128xf32> to vector<2x32xf32>
    %20 = math.tanh %18 : vector<2x32xf32>
    %21 = arith.mulf %19, %20 : vector<2x32xf32>
    %c0_9 = arith.constant 0 : index
    %c0_10 = arith.constant 0 : index
    %c0_11 = arith.constant 0 : index
    %22 = vector.load %arg11[%c0_9, %c0_10, %c0_11] : memref<6x2x32xf32, #tpu.memory_space<vmem>>, vector<1x2x32xf32>
    %23 = vector.shape_cast %22 : vector<1x2x32xf32> to vector<2x32xf32>
    %24 = vector.shape_cast %21 : vector<2x32xf32> to vector<1x2x32xf32>
    tpu.vector_store %arg11[%c0_9, %c0_10, %c0_11], %24 {strides = array<i32>} : memref<6x2x32xf32, #tpu.memory_space<vmem>>, vector<1x2x32xf32>,
    %c1 = arith.constant 1 : index
    %c0_12 = arith.constant 0 : index
    %c0_13 = arith.constant 0 : index
    %25 = vector.load %arg1[%c1, %c0_12, %c0_13] : memref<6x2x128xf32, #tpu.memory_space<vmem>>, vector<1x2x128xf32>
    %26 = vector.shape_cast %25 : vector<1x2x128xf32> to vector<2x128xf32>
    %cst_14 = arith.constant dense<0.000000e+00> : vector<2x128xf32>
    %27 = tpu.matmul %21, %0, %cst_14 {dimension_numbers = #tpu.dot_dimension_numbers<[1], [0], [0], [1], [0, 0, 1, 1], [], []>} : vector<2x32xf32>, vector<32x128xf32>, vector<2x128xf32> -> vector<2x128xf32>
    %28 = arith.addf %26, %27 : vector<2x128xf32>
    %29 = arith.negf %28 : vector<2x128xf32>
    %30 = math.exp %29 : vector<2x128xf32>
    %cst_15 = arith.constant 1.000000e+00 : f32
    %31 = vector.broadcast %cst_15 : f32 to vector<2x128xf32>
    %32 = arith.addf %31, %30 : vector<2x128xf32>
    %33 = arith.divf %31, %32 : vector<2x128xf32>
    %34 = math.tanh %28 : vector<2x128xf32>
    %35 = vector.extract_strided_slice %33 {offsets = [0, 32], sizes = [2, 32], strides = [1, 1]} : vector<2x128xf32> to vector<2x32xf32>
    %36 = arith.mulf %35, %18 : vector<2x32xf32>
    %37 = vector.extract_strided_slice %33 {offsets = [0, 0], sizes = [2, 32], strides = [1, 1]} : vector<2x128xf32> to vector<2x32xf32>
    %38 = vector.extract_strided_slice %34 {offsets = [0, 64], sizes = [2, 32], strides = [1, 1]} : vector<2x128xf32> to vector<2x32xf32>
    %39 = arith.mulf %37, %38 : vector<2x32xf32>
    %40 = arith.addf %36, %39 : vector<2x32xf32>
    %41 = vector.extract_strided_slice %33 {offsets = [0, 96], sizes = [2, 32], strides = [1, 1]} : vector<2x128xf32> to vector<2x32xf32>
    %42 = math.tanh %40 : vector<2x32xf32>
    %43 = arith.mulf %41, %42 : vector<2x32xf32>
    %c1_16 = arith.constant 1 : index
    %c0_17 = arith.constant 0 : index
    %c0_18 = arith.constant 0 : index
    %44 = vector.load %arg11[%c1_16, %c0_17, %c0_18] : memref<6x2x32xf32, #tpu.memory_space<vmem>>, vector<1x2x32xf32>
    %45 = vector.shape_cast %44 : vector<1x2x32xf32> to vector<2x32xf32>
    %46 = vector.shape_cast %43 : vector<2x32xf32> to vector<1x2x32xf32>
    tpu.vector_store %arg11[%c1_16, %c0_17, %c0_18], %46 {strides = array<i32>} : memref<6x2x32xf32, #tpu.memory_space<vmem>>, vector<1x2x32xf32>,
    %c2 = arith.constant 2 : index
    %c0_19 = arith.constant 0 : index
    %c0_20 = arith.constant 0 : index
    %47 = vector.load %arg1[%c2, %c0_19, %c0_20] : memref<6x2x128xf32, #tpu.memory_space<vmem>>, vector<1x2x128xf32>
    %48 = vector.shape_cast %47 : vector<1x2x128xf32> to vector<2x128xf32>
    %cst_21 = arith.constant dense<0.000000e+00> : vector<2x128xf32>
    %49 = tpu.matmul %43, %0, %cst_21 {dimension_numbers = #tpu.dot_dimension_numbers<[1], [0], [0], [1], [0, 0, 1, 1], [], []>} : vector<2x32xf32>, vector<32x128xf32>, vector<2x128xf32> -> vector<2x128xf32>
    %50 = arith.addf %48, %49 : vector<2x128xf32>
    %51 = arith.negf %50 : vector<2x128xf32>
    %52 = math.exp %51 : vector<2x128xf32>
    %cst_22 = arith.constant 1.000000e+00 : f32
    %53 = vector.broadcast %cst_22 : f32 to vector<2x128xf32>
    %54 = arith.addf %53, %52 : vector<2x128xf32>
    %55 = arith.divf %53, %54 : vector<2x128xf32>
    %56 = math.tanh %50 : vector<2x128xf32>
    %57 = vector.extract_strided_slice %55 {offsets = [0, 32], sizes = [2, 32], strides = [1, 1]} : vector<2x128xf32> to vector<2x32xf32>
    %58 = arith.mulf %57, %40 : vector<2x32xf32>
    %59 = vector.extract_strided_slice %55 {offsets = [0, 0], sizes = [2, 32], strides = [1, 1]} : vector<2x128xf32> to vector<2x32xf32>
    %60 = vector.extract_strided_slice %56 {offsets = [0, 64], sizes = [2, 32], strides = [1, 1]} : vector<2x128xf32> to vector<2x32xf32>
    %61 = arith.mulf %59, %60 : vector<2x32xf32>
    %62 = arith.addf %58, %61 : vector<2x32xf32>
    %63 = vector.extract_strided_slice %55 {offsets = [0, 96], sizes = [2, 32], strides = [1, 1]} : vector<2x128xf32> to vector<2x32xf32>
    %64 = math.tanh %62 : vector<2x32xf32>
    %65 = arith.mulf %63, %64 : vector<2x32xf32>
    %c2_23 = arith.constant 2 : index
    %c0_24 = arith.constant 0 : index
    %c0_25 = arith.constant 0 : index
    %66 = vector.load %arg11[%c2_23, %c0_24, %c0_25] : memref<6x2x32xf32, #tpu.memory_space<vmem>>, vector<1x2x32xf32>
    %67 = vector.shape_cast %66 : vector<1x2x32xf32> to vector<2x32xf32>
    %68 = vector.shape_cast %65 : vector<2x32xf32> to vector<1x2x32xf32>
    tpu.vector_store %arg11[%c2_23, %c0_24, %c0_25], %68 {strides = array<i32>} : memref<6x2x32xf32, #tpu.memory_space<vmem>>, vector<1x2x32xf32>,
    %c3 = arith.constant 3 : index
    %c0_26 = arith.constant 0 : index
    %c0_27 = arith.constant 0 : index
    %69 = vector.load %arg1[%c3, %c0_26, %c0_27] : memref<6x2x128xf32, #tpu.memory_space<vmem>>, vector<1x2x128xf32>
    %70 = vector.shape_cast %69 : vector<1x2x128xf32> to vector<2x128xf32>
    %cst_28 = arith.constant dense<0.000000e+00> : vector<2x128xf32>
    %71 = tpu.matmul %65, %0, %cst_28 {dimension_numbers = #tpu.dot_dimension_numbers<[1], [0], [0], [1], [0, 0, 1, 1], [], []>} : vector<2x32xf32>, vector<32x128xf32>, vector<2x128xf32> -> vector<2x128xf32>
    %72 = arith.addf %70, %71 : vector<2x128xf32>
    %73 = arith.negf %72 : vector<2x128xf32>
    %74 = math.exp %73 : vector<2x128xf32>
    %cst_29 = arith.constant 1.000000e+00 : f32
    %75 = vector.broadcast %cst_29 : f32 to vector<2x128xf32>
    %76 = arith.addf %75, %74 : vector<2x128xf32>
    %77 = arith.divf %75, %76 : vector<2x128xf32>
    %78 = math.tanh %72 : vector<2x128xf32>
    %79 = vector.extract_strided_slice %77 {offsets = [0, 32], sizes = [2, 32], strides = [1, 1]} : vector<2x128xf32> to vector<2x32xf32>
    %80 = arith.mulf %79, %62 : vector<2x32xf32>
    %81 = vector.extract_strided_slice %77 {offsets = [0, 0], sizes = [2, 32], strides = [1, 1]} : vector<2x128xf32> to vector<2x32xf32>
    %82 = vector.extract_strided_slice %78 {offsets = [0, 64], sizes = [2, 32], strides = [1, 1]} : vector<2x128xf32> to vector<2x32xf32>
    %83 = arith.mulf %81, %82 : vector<2x32xf32>
    %84 = arith.addf %80, %83 : vector<2x32xf32>
    %85 = vector.extract_strided_slice %77 {offsets = [0, 96], sizes = [2, 32], strides = [1, 1]} : vector<2x128xf32> to vector<2x32xf32>
    %86 = math.tanh %84 : vector<2x32xf32>
    %87 = arith.mulf %85, %86 : vector<2x32xf32>
    %c3_30 = arith.constant 3 : index
    %c0_31 = arith.constant 0 : index
    %c0_32 = arith.constant 0 : index
    %88 = vector.load %arg11[%c3_30, %c0_31, %c0_32] : memref<6x2x32xf32, #tpu.memory_space<vmem>>, vector<1x2x32xf32>
    %89 = vector.shape_cast %88 : vector<1x2x32xf32> to vector<2x32xf32>
    %90 = vector.shape_cast %87 : vector<2x32xf32> to vector<1x2x32xf32>
    tpu.vector_store %arg11[%c3_30, %c0_31, %c0_32], %90 {strides = array<i32>} : memref<6x2x32xf32, #tpu.memory_space<vmem>>, vector<1x2x32xf32>,
    %c4 = arith.constant 4 : index
    %c0_33 = arith.constant 0 : index
    %c0_34 = arith.constant 0 : index
    %91 = vector.load %arg1[%c4, %c0_33, %c0_34] : memref<6x2x128xf32, #tpu.memory_space<vmem>>, vector<1x2x128xf32>
    %92 = vector.shape_cast %91 : vector<1x2x128xf32> to vector<2x128xf32>
    %cst_35 = arith.constant dense<0.000000e+00> : vector<2x128xf32>
    %93 = tpu.matmul %87, %0, %cst_35 {dimension_numbers = #tpu.dot_dimension_numbers<[1], [0], [0], [1], [0, 0, 1, 1], [], []>} : vector<2x32xf32>, vector<32x128xf32>, vector<2x128xf32> -> vector<2x128xf32>
    %94 = arith.addf %92, %93 : vector<2x128xf32>
    %95 = arith.negf %94 : vector<2x128xf32>
    %96 = math.exp %95 : vector<2x128xf32>
    %cst_36 = arith.constant 1.000000e+00 : f32
    %97 = vector.broadcast %cst_36 : f32 to vector<2x128xf32>
    %98 = arith.addf %97, %96 : vector<2x128xf32>
    %99 = arith.divf %97, %98 : vector<2x128xf32>
    %100 = math.tanh %94 : vector<2x128xf32>
    %101 = vector.extract_strided_slice %99 {offsets = [0, 32], sizes = [2, 32], strides = [1, 1]} : vector<2x128xf32> to vector<2x32xf32>
    %102 = arith.mulf %101, %84 : vector<2x32xf32>
    %103 = vector.extract_strided_slice %99 {offsets = [0, 0], sizes = [2, 32], strides = [1, 1]} : vector<2x128xf32> to vector<2x32xf32>
    %104 = vector.extract_strided_slice %100 {offsets = [0, 64], sizes = [2, 32], strides = [1, 1]} : vector<2x128xf32> to vector<2x32xf32>
    %105 = arith.mulf %103, %104 : vector<2x32xf32>
    %106 = arith.addf %102, %105 : vector<2x32xf32>
    %107 = vector.extract_strided_slice %99 {offsets = [0, 96], sizes = [2, 32], strides = [1, 1]} : vector<2x128xf32> to vector<2x32xf32>
    %108 = math.tanh %106 : vector<2x32xf32>
    %109 = arith.mulf %107, %108 : vector<2x32xf32>
    %c4_37 = arith.constant 4 : index
    %c0_38 = arith.constant 0 : index
    %c0_39 = arith.constant 0 : index
    %110 = vector.load %arg11[%c4_37, %c0_38, %c0_39] : memref<6x2x32xf32, #tpu.memory_space<vmem>>, vector<1x2x32xf32>
    %111 = vector.shape_cast %110 : vector<1x2x32xf32> to vector<2x32xf32>
    %112 = vector.shape_cast %109 : vector<2x32xf32> to vector<1x2x32xf32>
    tpu.vector_store %arg11[%c4_37, %c0_38, %c0_39], %112 {strides = array<i32>} : memref<6x2x32xf32, #tpu.memory_space<vmem>>, vector<1x2x32xf32>,
    %c5 = arith.constant 5 : index
    %c0_40 = arith.constant 0 : index
    %c0_41 = arith.constant 0 : index
    %113 = vector.load %arg1[%c5, %c0_40, %c0_41] : memref<6x2x128xf32, #tpu.memory_space<vmem>>, vector<1x2x128xf32>
    %114 = vector.shape_cast %113 : vector<1x2x128xf32> to vector<2x128xf32>
    %cst_42 = arith.constant dense<0.000000e+00> : vector<2x128xf32>
    %115 = tpu.matmul %109, %0, %cst_42 {dimension_numbers = #tpu.dot_dimension_numbers<[1], [0], [0], [1], [0, 0, 1, 1], [], []>} : vector<2x32xf32>, vector<32x128xf32>, vector<2x128xf32> -> vector<2x128xf32>
    %116 = arith.addf %114, %115 : vector<2x128xf32>
    %117 = arith.negf %116 : vector<2x128xf32>
    %118 = math.exp %117 : vector<2x128xf32>
    %cst_43 = arith.constant 1.000000e+00 : f32
    %119 = vector.broadcast %cst_43 : f32 to vector<2x128xf32>
    %120 = arith.addf %119, %118 : vector<2x128xf32>
    %121 = arith.divf %119, %120 : vector<2x128xf32>
    %122 = math.tanh %116 : vector<2x128xf32>
    %123 = vector.extract_strided_slice %121 {offsets = [0, 32], sizes = [2, 32], strides = [1, 1]} : vector<2x128xf32> to vector<2x32xf32>
    %124 = arith.mulf %123, %106 : vector<2x32xf32>
    %125 = vector.extract_strided_slice %121 {offsets = [0, 0], sizes = [2, 32], strides = [1, 1]} : vector<2x128xf32> to vector<2x32xf32>
    %126 = vector.extract_strided_slice %122 {offsets = [0, 64], sizes = [2, 32], strides = [1, 1]} : vector<2x128xf32> to vector<2x32xf32>
    %127 = arith.mulf %125, %126 : vector<2x32xf32>
    %128 = arith.addf %124, %127 : vector<2x32xf32>
    %129 = vector.extract_strided_slice %121 {offsets = [0, 96], sizes = [2, 32], strides = [1, 1]} : vector<2x128xf32> to vector<2x32xf32>
    %130 = math.tanh %128 : vector<2x32xf32>
    %131 = arith.mulf %129, %130 : vector<2x32xf32>
    %c5_44 = arith.constant 5 : index
    %c0_45 = arith.constant 0 : index
    %c0_46 = arith.constant 0 : index
    %132 = vector.load %arg11[%c5_44, %c0_45, %c0_46] : memref<6x2x32xf32, #tpu.memory_space<vmem>>, vector<1x2x32xf32>
    %133 = vector.shape_cast %132 : vector<1x2x32xf32> to vector<2x32xf32>
    %134 = vector.shape_cast %131 : vector<2x32xf32> to vector<1x2x32xf32>
    tpu.vector_store %arg11[%c5_44, %c0_45, %c0_46], %134 {strides = array<i32>} : memref<6x2x32xf32, #tpu.memory_space<vmem>>, vector<1x2x32xf32>,
    %c0_47 = arith.constant 0 : index
    %c0_48 = arith.constant 0 : index
    %135 = vector.load %arg12[%c0_47, %c0_48] : memref<2x32xf32, #tpu.memory_space<vmem>>, vector<2x32xf32>
    tpu.vector_store %arg12[%c0_47, %c0_48], %131 {strides = array<i32>} : memref<2x32xf32, #tpu.memory_space<vmem>>, vector<2x32xf32>,
    %c0_49 = arith.constant 0 : index
    %c0_50 = arith.constant 0 : index
    %136 = vector.load %arg13[%c0_49, %c0_50] : memref<2x32xf32, #tpu.memory_space<vmem>>, vector<2x32xf32>
    tpu.vector_store %arg13[%c0_49, %c0_50], %128 {strides = array<i32>} : memref<2x32xf32, #tpu.memory_space<vmem>>, vector<2x32xf32>,
    %c0_51 = arith.constant 0 : index
    %c0_52 = arith.constant 0 : index
    %c0_53 = arith.constant 0 : index
    %137 = vector.load %arg11[%c0_51, %c0_52, %c0_53] : memref<6x2x32xf32, #tpu.memory_space<vmem>>, vector<6x2x32xf32>
    %138 = vector.shape_cast %137 : vector<6x2x32xf32> to vector<12x32xf32>
    %c0_54 = arith.constant 0 : index
    %c0_55 = arith.constant 0 : index
    %139 = vector.load %arg7[%c0_54, %c0_55] : memref<32x32xf32, #tpu.memory_space<vmem>>, vector<32x32xf32>
    %cst_56 = arith.constant dense<0.000000e+00> : vector<12x32xf32>
    %140 = tpu.matmul %138, %139, %cst_56 {dimension_numbers = #tpu.dot_dimension_numbers<[1], [0], [0], [1], [0, 0, 1, 1], [], []>} : vector<12x32xf32>, vector<32x32xf32>, vector<12x32xf32> -> vector<12x32xf32>
    %c0_57 = arith.constant 0 : index
    %c0_58 = arith.constant 0 : index
    %c0_59 = arith.constant 0 : index
    %141 = vector.load %arg5[%c0_57, %c0_58, %c0_59] : memref<2x8x32xf32, #tpu.memory_space<vmem>>, vector<2x8x32xf32>
    %142 = vector.shape_cast %141 : vector<2x8x32xf32> to vector<16x32xf32>
    %c0_60 = arith.constant 0 : index
    %c0_61 = arith.constant 0 : index
    %143 = vector.load %arg8[%c0_60, %c0_61] : memref<32x32xf32, #tpu.memory_space<vmem>>, vector<32x32xf32>
    %cst_62 = arith.constant dense<0.000000e+00> : vector<16x32xf32>
    %144 = tpu.matmul %142, %143, %cst_62 {dimension_numbers = #tpu.dot_dimension_numbers<[1], [0], [0], [1], [0, 0, 1, 1], [], []>} : vector<16x32xf32>, vector<32x32xf32>, vector<16x32xf32> -> vector<16x32xf32>
    %145 = vector.shape_cast %144 : vector<16x32xf32> to vector<2x8x32xf32>
    %146 = vector.shape_cast %140 : vector<12x32xf32> to vector<12x1x32xf32>
    %147 = tpu.concatenate %145, %145, %145, %145, %145, %145 in 0 : vector<2x8x32xf32>, vector<2x8x32xf32>, vector<2x8x32xf32>, vector<2x8x32xf32>, vector<2x8x32xf32>, vector<2x8x32xf32> -> vector<12x8x32xf32>
    %148 = vector.broadcast %146 : vector<12x1x32xf32> to vector<12x8x32xf32>
    %149 = arith.addf %148, %147 : vector<12x8x32xf32>
    %c0_63 = arith.constant 0 : index
    %c0_64 = arith.constant 0 : index
    %150 = vector.load %arg9[%c0_63, %c0_64] : memref<1x32xf32, #tpu.memory_space<vmem>>, vector<1x32xf32>
    %151 = vector.shape_cast %150 : vector<1x32xf32> to vector<1x1x32xf32>
    %152 = vector.broadcast %151 : vector<1x1x32xf32> to vector<12x8x32xf32>
    %153 = arith.addf %149, %152 : vector<12x8x32xf32>
    %154 = math.tanh %153 : vector<12x8x32xf32>
    %c0_65 = arith.constant 0 : index
    %c0_66 = arith.constant 0 : index
    %155 = vector.load %arg10[%c0_65, %c0_66] : memref<1x32xf32, #tpu.memory_space<vmem>>, vector<1x32xf32>
    %156 = vector.shape_cast %155 : vector<1x32xf32> to vector<1x1x32xf32>
    %157 = vector.broadcast %156 : vector<1x1x32xf32> to vector<12x8x32xf32>
    %158 = arith.mulf %154, %157 : vector<12x8x32xf32>
    %cst_67 = arith.constant dense<0.000000e+00> : vector<12x8xf32>
    %159 = vector.multi_reduction <add>, %158, %cst_67 [2] : vector<12x8x32xf32> to vector<12x8xf32>
    %160 = vector.shape_cast %159 : vector<12x8xf32> to vector<6x2x8xf32>
    %c0_68 = arith.constant 0 : index
    %c0_69 = arith.constant 0 : index
    %161 = vector.load %arg6[%c0_68, %c0_69] : memref<2x8xf32, #tpu.memory_space<vmem>>, vector<2x8xf32>
    %162 = vector.shape_cast %161 : vector<2x8xf32> to vector<1x2x8xf32>
    %163 = vector.shape_cast %162 : vector<1x2x8xf32> to vector<1x2x8xf32>
    %164 = vector.broadcast %163 : vector<1x2x8xf32> to vector<6x2x8xf32>
    %cst_70 = arith.constant 5.000000e-01 : f32
    %165 = vector.broadcast %cst_70 : f32 to vector<6x2x8xf32>
    %166 = arith.cmpf ogt, %164, %165 : vector<6x2x8xf32>
    %cst_71 = arith.constant -6.550400e+04 : f32
    %167 = vector.broadcast %cst_71 : f32 to vector<6x2x8xf32>
    %168 = arith.select %166, %160, %167 : vector<6x2x8xi1>, vector<6x2x8xf32>
    %cst_72 = arith.constant dense<0xFF800000> : vector<6x2xf32>
    %169 = vector.multi_reduction <maximumf>, %168, %cst_72 [2] : vector<6x2x8xf32> to vector<6x2xf32>
    %170 = vector.shape_cast %169 : vector<6x2xf32> to vector<6x2x1xf32>
    %171 = vector.broadcast %170 : vector<6x2x1xf32> to vector<6x2x8xf32>
    %172 = arith.subf %168, %171 : vector<6x2x8xf32>
    %173 = math.exp %172 : vector<6x2x8xf32>
    %cst_73 = arith.constant dense<0.000000e+00> : vector<6x2xf32>
    %174 = vector.multi_reduction <add>, %173, %cst_73 [2] : vector<6x2x8xf32> to vector<6x2xf32>
    %175 = vector.shape_cast %174 : vector<6x2xf32> to vector<6x2x1xf32>
    %176 = tpu.reciprocal %175 : vector<6x2x1xf32> -> vector<6x2x1xf32>
    %177 = vector.broadcast %176 : vector<6x2x1xf32> to vector<6x2x8xf32>
    %178 = arith.mulf %173, %177 : vector<6x2x8xf32>
    %179 = tpu.transpose %178, [1, 0, 2] : vector<6x2x8xf32> -> vector<2x6x8xf32>
    "tpu.trace_start"() <{level = 10 : i32, message = "btk,bkc->btc"}> : () -> ()
    %cst_74 = arith.constant dense<0.000000e+00> : vector<2x6x32xf32>
    %180 = tpu.matmul %179, %141, %cst_74 {dimension_numbers = #tpu.dot_dimension_numbers<[2], [1], [1], [2], [0, 0, 0, 1, 1, 2], [0], [0]>} : vector<2x6x8xf32>, vector<2x8x32xf32>, vector<2x6x32xf32> -> vector<2x6x32xf32>
    "tpu.trace_stop"() : () -> ()
    %181 = tpu.transpose %180, [1, 0, 2] : vector<2x6x32xf32> -> vector<6x2x32xf32>
    %cst_75 = arith.constant 0.000000e+00 : f32
    %182 = vector.broadcast %cst_75 : f32 to vector<6x2x120xf32>
    %183 = tpu.concatenate %178, %182 in 2 : vector<6x2x8xf32>, vector<6x2x120xf32> -> vector<6x2x128xf32>
    %c0_76 = arith.constant 0 : index
    %c0_77 = arith.constant 0 : index
    %c0_78 = arith.constant 0 : index
    %184 = vector.load %arg15[%c0_76, %c0_77, %c0_78] : memref<6x2x128xf32, #tpu.memory_space<vmem>>, vector<6x2x128xf32>
    tpu.vector_store %arg15[%c0_76, %c0_77, %c0_78], %183 {strides = array<i32>} : memref<6x2x128xf32, #tpu.memory_space<vmem>>, vector<6x2x128xf32>,
    %cst_79 = arith.constant 0.000000e+00 : f32
    %185 = vector.broadcast %cst_79 : f32 to vector<6x2x96xf32>
    %186 = tpu.concatenate %181, %185 in 2 : vector<6x2x32xf32>, vector<6x2x96xf32> -> vector<6x2x128xf32>
    %c0_80 = arith.constant 0 : index
    %c0_81 = arith.constant 0 : index
    %c0_82 = arith.constant 0 : index
    %187 = vector.load %arg14[%c0_80, %c0_81, %c0_82] : memref<6x2x128xf32, #tpu.memory_space<vmem>>, vector<6x2x128xf32>
    tpu.vector_store %arg14[%c0_80, %c0_81, %c0_82], %186 {strides = array<i32>} : memref<6x2x128xf32, #tpu.memory_space<vmem>>, vector<6x2x128xf32>,
    return
  }
  func.func @transform_0(%arg0: i32) -> (i32, i32, i32) {
    %c0_i32 = arith.constant 0 : i32
    %c0_i32_0 = arith.constant 0 : i32
    %c0_i32_1 = arith.constant 0 : i32
    %c0_i32_2 = arith.constant 0 : i32
    return %c0_i32, %c0_i32_0, %c0_i32_1 : i32, i32, i32
  }
  func.func @transform_1(%arg0: i32) -> (i32, i32) {
    %c0_i32 = arith.constant 0 : i32
    %c0_i32_0 = arith.constant 0 : i32
    %c0_i32_1 = arith.constant 0 : i32
    return %c0_i32, %c0_i32_0 : i32, i32
  }
  func.func @transform_2(%arg0: i32) -> (i32, i32) {
    %c0_i32 = arith.constant 0 : i32
    %c0_i32_0 = arith.constant 0 : i32
    %c0_i32_1 = arith.constant 0 : i32
    return %c0_i32, %c0_i32_0 : i32, i32
  }
  func.func @transform_3(%arg0: i32) -> (i32, i32) {
    %c0_i32 = arith.constant 0 : i32
    %c0_i32_0 = arith.constant 0 : i32
    %c0_i32_1 = arith.constant 0 : i32
    return %c0_i32, %c0_i32_0 : i32, i32
  }
  func.func @transform_4(%arg0: i32) -> (i32, i32, i32) {
    %c0_i32 = arith.constant 0 : i32
    %c0_i32_0 = arith.constant 0 : i32
    %c0_i32_1 = arith.constant 0 : i32
    %c0_i32_2 = arith.constant 0 : i32
    return %c0_i32, %c0_i32_0, %c0_i32_1 : i32, i32, i32
  }
  func.func @transform_5(%arg0: i32) -> (i32, i32) {
    %c0_i32 = arith.constant 0 : i32
    %c0_i32_0 = arith.constant 0 : i32
    %c0_i32_1 = arith.constant 0 : i32
    return %c0_i32, %c0_i32_0 : i32, i32
  }
  func.func @transform_6(%arg0: i32) -> (i32, i32) {
    %c0_i32 = arith.constant 0 : i32
    %c0_i32_0 = arith.constant 0 : i32
    %c0_i32_1 = arith.constant 0 : i32
    return %c0_i32, %c0_i32_0 : i32, i32
  }
  func.func @transform_7(%arg0: i32) -> (i32, i32) {
    %c0_i32 = arith.constant 0 : i32
    %c0_i32_0 = arith.constant 0 : i32
    %c0_i32_1 = arith.constant 0 : i32
    return %c0_i32, %c0_i32_0 : i32, i32
  }
  func.func @transform_8(%arg0: i32) -> (i32, i32) {
    %c0_i32 = arith.constant 0 : i32
    %c0_i32_0 = arith.constant 0 : i32
    %c0_i32_1 = arith.constant 0 : i32
    return %c0_i32, %c0_i32_0 : i32, i32
  }
  func.func @transform_9(%arg0: i32) -> (i32, i32) {
    %c0_i32 = arith.constant 0 : i32
    %c0_i32_0 = arith.constant 0 : i32
    %c0_i32_1 = arith.constant 0 : i32
    return %c0_i32, %c0_i32_0 : i32, i32
  }
  func.func @transform_10(%arg0: i32) -> (i32, i32, i32) {
    %c0_i32 = arith.constant 0 : i32
    %c0_i32_0 = arith.constant 0 : i32
    %c0_i32_1 = arith.constant 0 : i32
    %c0_i32_2 = arith.constant 0 : i32
    return %c0_i32, %c0_i32_0, %c0_i32_1 : i32, i32, i32
  }
  func.func @transform_11(%arg0: i32) -> (i32, i32) {
    %c0_i32 = arith.constant 0 : i32
    %c0_i32_0 = arith.constant 0 : i32
    %c0_i32_1 = arith.constant 0 : i32
    return %c0_i32, %c0_i32_0 : i32, i32
  }
  func.func @transform_12(%arg0: i32) -> (i32, i32) {
    %c0_i32 = arith.constant 0 : i32
    %c0_i32_0 = arith.constant 0 : i32
    %c0_i32_1 = arith.constant 0 : i32
    return %c0_i32, %c0_i32_0 : i32, i32
  }
  func.func @transform_13(%arg0: i32) -> (i32, i32, i32) {
    %c0_i32 = arith.constant 0 : i32
    %c0_i32_0 = arith.constant 0 : i32
    %c0_i32_1 = arith.constant 0 : i32
    %c0_i32_2 = arith.constant 0 : i32
    return %c0_i32, %c0_i32_0, %c0_i32_1 : i32, i32, i32
  }
  func.func @transform_14(%arg0: i32) -> (i32, i32, i32) {
    %c0_i32 = arith.constant 0 : i32
    %c0_i32_0 = arith.constant 0 : i32
    %c0_i32_1 = arith.constant 0 : i32
    %c0_i32_2 = arith.constant 0 : i32
    return %c0_i32, %c0_i32_0, %c0_i32_1 : i32, i32, i32
  }
}

</mosaic_0001>

<llo_original>
// kernel: recurrent_attention_forward.1
$region0: #{recurrent_attention_forward.1}
  #allocation0 [shape = 'u32[]', space=smem, size = 0x4, offset = 0x4, fixed_abs, tag = 'smem constant byte address 0x4 - core index']
  #allocation1 [shape = 'u32[144,128]{1,0:T(1,128)}', space=vmem, size = 0x12000, scoped, tag = 'internal scratch']
  %s0 = inlined_call_operand.vmem [shape: f32[6,2,128], index: 0, kind: input, shape index: {}]
  %s1 = inlined_call_operand.vmem [shape: f32[2,32], index: 1, kind: input, shape index: {}]
  %s2 = inlined_call_operand.vmem [shape: f32[2,32], index: 2, kind: input, shape index: {}]
  %s3 = inlined_call_operand.vmem [shape: f32[32,128], index: 3, kind: input, shape index: {}]
  %s4 = inlined_call_operand.vmem [shape: f32[2,8,32], index: 4, kind: input, shape index: {}]
  %s5 = inlined_call_operand.vmem [shape: f32[2,8], index: 5, kind: input, shape index: {}]
  %s6 = inlined_call_operand.vmem [shape: f32[32,32], index: 6, kind: input, shape index: {}]
  %s7 = inlined_call_operand.vmem [shape: f32[32,32], index: 7, kind: input, shape index: {}]
  %s8 = inlined_call_operand.vmem [shape: f32[1,32], index: 8, kind: input, shape index: {}]
  %s9 = inlined_call_operand.vmem [shape: f32[1,32], index: 9, kind: input, shape index: {}]
  %s10 = inlined_call_operand.hbm [shape: f32[6,2,32], index: 10, kind: output, shape index: {0}]
  %s11 = inlined_call_operand.hbm [shape: f32[2,32], index: 11, kind: output, shape index: {1}]
  %s12 = inlined_call_operand.hbm [shape: f32[2,32], index: 12, kind: output, shape index: {2}]
  %s13 = inlined_call_operand.hbm [shape: f32[6,2,128], index: 13, kind: output, shape index: {3}]
  %s14 = inlined_call_operand.hbm [shape: f32[6,2,128], index: 14, kind: output, shape index: {4}]
  %15 = xla_tuple %s10, %s11, %s12, %s13, %s14
  %s16 = sld [smem:[#allocation0]]
  $region82: #{recurrent_attention_forward.1} parent=0
    _
  %s18 = ssub.s32 1, %s16
  %s19 = scalar_select 0, %s18, %s16
  $region1: #{recurrent_attention_forward.1} parent=0
    #allocation2 [shape = 'u8[6144]{0}', space=vmem, size = 0x1800, scoped, tag = 'output window, operand 0, single buffered']
    #allocation3 [shape = 's32[1]{0}', space=sflag, size = 0x4, scoped, tag = 'scoped memory for recurrent_attention_forward.1']
    #allocation4 [shape = 'u8[1024]{0}', space=vmem, size = 0x400, scoped, tag = 'output window, operand 1, single buffered']
    #allocation5 [shape = 's32[1]{0}', space=sflag, size = 0x4, scoped, tag = 'scoped memory for recurrent_attention_forward.1']
    #allocation6 [shape = 'u8[1024]{0}', space=vmem, size = 0x400, scoped, tag = 'output window, operand 2, single buffered']
    #allocation7 [shape = 'u8[6144]{0}', space=vmem, size = 0x1800, scoped, tag = 'output window, operand 3, single buffered']
    #allocation8 [shape = 's32[1]{0}', space=sflag, size = 0x4, scoped, tag = 'scoped memory for recurrent_attention_forward.1']
    #allocation9 [shape = 'u8[6144]{0}', space=vmem, size = 0x1800, scoped, tag = 'output window, operand 4, single buffered']
    %20 = vsyncpa [#allocation3], 0
    %21 = vsyncpa [#allocation5], 0
    %22 = vsyncpa [#allocation8], 0
    // Predicated region
    $region2: #{recurrent_attention_forward.1} parent=1 // pred_check
      _
    $region3: #{recurrent_attention_forward.1} parent=1 // pred_check_branch
      %24 = sbr.rel (0) target = $region5
    $region4: #{recurrent_attention_forward.1} parent=1 // pred_region
      _
    $region5: #{recurrent_attention_forward.1} parent=1 // pred_fallthru
      _
    // Predicated region
    $region6: #{recurrent_attention_forward.1} parent=1 // pred_check
      _
    $region7: #{recurrent_attention_forward.1} parent=1 // pred_check_branch
      %26 = sbr.rel (0) target = $region9
    $region8: #{recurrent_attention_forward.1} parent=1 // pred_region
      _
    $region9: #{recurrent_attention_forward.1} parent=1 // pred_fallthru
      _
    // Predicated region
    $region10: #{recurrent_attention_forward.1} parent=1 // pred_check
      _
    $region11: #{recurrent_attention_forward.1} parent=1 // pred_check_branch
      %28 = sbr.rel (0) target = $region13
    $region12: #{recurrent_attention_forward.1} parent=1 // pred_region
      _
    $region13: #{recurrent_attention_forward.1} parent=1 // pred_fallthru
      _
    // Predicated region
    $region14: #{recurrent_attention_forward.1} parent=1 // pred_check
      _
    $region15: #{recurrent_attention_forward.1} parent=1 // pred_check_branch
      %30 = sbr.rel (0) target = $region17
    $region16: #{recurrent_attention_forward.1} parent=1 // pred_region
      _
    $region17: #{recurrent_attention_forward.1} parent=1 // pred_fallthru
      _
    // Predicated region
    $region18: #{recurrent_attention_forward.1} parent=1 // pred_check
      _
    $region19: #{recurrent_attention_forward.1} parent=1 // pred_check_branch
      %32 = sbr.rel (0) target = $region21
    $region20: #{recurrent_attention_forward.1} parent=1 // pred_region
      _
    $region21: #{recurrent_attention_forward.1} parent=1 // pred_fallthru
      _
    // Predicated region
    $region22: #{recurrent_attention_forward.1} parent=1 // pred_check
      _
    $region23: #{recurrent_attention_forward.1} parent=1 // pred_check_branch
      %34 = sbr.rel (0) target = $region25
    $region24: #{recurrent_attention_forward.1} parent=1 // pred_region
      _
    $region25: #{recurrent_attention_forward.1} parent=1 // pred_fallthru
      _
    // Predicated region
    $region26: #{recurrent_attention_forward.1} parent=1 // pred_check
      _
    $region27: #{recurrent_attention_forward.1} parent=1 // pred_check_branch
      %36 = sbr.rel (0) target = $region29
    $region28: #{recurrent_attention_forward.1} parent=1 // pred_region
      _
    $region29: #{recurrent_attention_forward.1} parent=1 // pred_fallthru
      _
    // Predicated region
    $region30: #{recurrent_attention_forward.1} parent=1 // pred_check
      _
    $region31: #{recurrent_attention_forward.1} parent=1 // pred_check_branch
      %38 = sbr.rel (0) target = $region33
    $region32: #{recurrent_attention_forward.1} parent=1 // pred_region
      _
    $region33: #{recurrent_attention_forward.1} parent=1 // pred_fallthru
      _
    // Predicated region
    $region34: #{recurrent_attention_forward.1} parent=1 // pred_check
      _
    $region35: #{recurrent_attention_forward.1} parent=1 // pred_check_branch
      %40 = sbr.rel (0) target = $region37
    $region36: #{recurrent_attention_forward.1} parent=1 // pred_region
      _
    $region37: #{recurrent_attention_forward.1} parent=1 // pred_fallthru
      _
    // Predicated region
    $region38: #{recurrent_attention_forward.1} parent=1 // pred_check
      _
    $region39: #{recurrent_attention_forward.1} parent=1 // pred_check_branch
      %42 = sbr.rel (0) target = $region41
    $region40: #{recurrent_attention_forward.1} parent=1 // pred_region
      _
    $region41: #{recurrent_attention_forward.1} parent=1 // pred_fallthru
      _
    %v43 = vld [vmem:[%s3] sm:$0xff]
    %v44 = vld [vmem:[%s3 + $0x8] sm:$0xff]
    %v45 = vld [vmem:[%s3 + $0x10] sm:$0xff]
    %v46 = vld [vmem:[%s3 + $0x18] sm:$0xff]
    %v47 = vld [vmem:[%s1] sm:$0x3]
    %v48 = vld [vmem:[%s2] sm:$0x3]
    %v49 = vld [vmem:[%s0] sm:$0x3]
    %vm50 = vcmask 261120
    %v52 = vsel %vm50, %v47, 0
    %54 = vmatprep.subr.mxu0 0.0
    %55 = vmatpush1.msra.mxu0 %v43
    %56 = vmatprep.subr.mxu0 0.0
    %57 = vmatpush1.msra.mxu0 %v44
    %58 = vmatprep.subr.mxu0 0.0
    %59 = vmatpush1.msra.mxu0 %v45
    %60 = vmatprep.subr.mxu0 0.0
    %61 = vmatpush1.msra.mxu0 %v46
    %62 = vmatprep.subr.mxu0 0.0
    %63 = vmatpush1.msra.mxu0 0.0
    %64 = vmatprep.subr.mxu0 0.0
    %65 = vmatpush1.msra.mxu0 0.0
    %66 = vmatprep.subr.mxu0 0.0
    %67 = vmatpush1.msra.mxu0 0.0
    %68 = vmatprep.subr.mxu0 0.0
    %69 = vmatpush1.msra.mxu0 0.0
    %70 = vmatprep.subr.mxu0 0.0
    %71 = vmatpush1.msra.mxu0 0.0
    %72 = vmatprep.subr.mxu0 0.0
    %73 = vmatpush1.msra.mxu0 0.0
    %74 = vmatprep.subr.mxu0 0.0
    %75 = vmatpush1.msra.mxu0 0.0
    %76 = vmatprep.subr.mxu0 0.0
    %77 = vmatpush1.msra.mxu0 0.0
    %78 = vmatprep.subr.mxu0 0.0
    %79 = vmatpush1.msra.mxu0 0.0
    %80 = vmatprep.subr.mxu0 0.0
    %81 = vmatpush1.msra.mxu0 0.0
    %82 = vmatprep.subr.mxu0 0.0
    %83 = vmatpush1.msra.mxu0 0.0
    %84 = vmatprep.subr.mxu0 0.0
    %85 = vmatpush1.msra.mxu0 0.0
    %86 = vmatprep.subr.mxu0 0.0
    %87 = vmatpush1.msra.mxu0 0.0
    %88 = vmatprep.subr.mxu0 0.0
    %89 = vmatpush1.msra.mxu0 0.0
    %90 = vmatprep.subr.mxu0 0.0
    %91 = vmatpush1.msra.mxu0 0.0
    %92 = vmatprep.subr.mxu0 0.0
    %93 = vmatpush1.msra.mxu0 0.0
    %94 = vmatprep.subr.mxu0 0.0
    %95 = vmatpush1.msra.mxu0 0.0
    %96 = vmatprep.subr.mxu0 0.0
    %97 = vmatpush1.msra.mxu0 0.0
    %98 = vmatprep.subr.mxu0 0.0
    %99 = vmatpush1.msra.mxu0 0.0
    %100 = vmatprep.subr.mxu0 0.0
    %101 = vmatpush1.msra.mxu0 0.0
    %102 = vmatprep.subr.mxu0 0.0
    %103 = vmatpush1.msra.mxu0 0.0
    %104 = vmatprep.subr.mxu0 0.0
    %105 = vmatpush1.msra.mxu0 0.0
    %106 = vmatprep.subr.mxu0 0.0
    %107 = vmatpush1.msra.mxu0 0.0
    %108 = vmatprep.subr.mxu0 0.0
    %109 = vmatpush1.msra.mxu0 0.0
    %110 = vmatprep.subr.mxu0 0.0
    %111 = vmatpush1.msra.mxu0 0.0
    %112 = vmatprep.subr.mxu0 0.0
    %113 = vmatpush1.msra.mxu0 0.0
    %114 = vmatprep.subr.mxu0 0.0
    %115 = vmatpush1.msra.mxu0 0.0
    %116 = vmatprep.subr.mxu0 0.0
    %117 = vmatpush1.msra.mxu0 0.0
    %118 = vmatprep.mubr.f32.mxu0 0.0
    %119 = vmatmul.mubr.f32.gmra.mrb[0].mxu0 %v52
    %v120 = vpop.f32.mrb[0].mxu0
    %v121 = vadd.f32 0.0, %v120
    %v122 = vpop.f32.mrb[0].mxu0
    %123 = vdwg.mxu0
    %v124 = vadd.f32 %v49, %v121
    %v125 = vxor.u32 %v124, 2147483648
    %v126 = vmul.f32 %v125, 1.442695
    %v127 = vpow.pop %v126
    %v128 = vadd.f32 %v127, 1.0
    %v129 = vrcp.pop %v128
    %v130 = vmul.f32 1.0, %v129
    %v131 = vtanh.pop %v124
    %133 = vrot.lane.b32.xlu0 %v48, 32
    %v134 = vpop.permute.xlu0 %133
    %v136 = vmul.f32 %v130, %v134
    %138 = vrot.lane.b32.xlu0 %v131, 64
    %v139 = vpop.permute.xlu0 %138
    %v141 = vmul.f32 %v130, %v139
    %143 = vrot.lane.b32.xlu0 %v141, 32
    %v144 = vpop.permute.xlu0 %143
    %v146 = vadd.f32 %v136, %v144
    %v147 = vtanh.pop %v146
    %149 = vrot.lane.b32.xlu0 %v147, 64
    %v150 = vpop.permute.xlu0 %149
    %v152 = vmul.f32 %v130, %v150
    %154 = vrot.lane.b32.xlu0 %v152, 32
    %v155 = vpop.permute.xlu0 %154
    %vm157 = vcmask 254976
    %158 = vst.msk [vmem:[#allocation2] sm:$0x3] %vm157, %v155
    %s159 = scalar_lea.vmem %s0, 2
    %v160 = vld [vmem:[%s159] sm:$0x3]
    %v161 = vsel %vm50, %v155, 0
    %163 = vmatprep.subr.mxu0 0.0
    %164 = vmatpush1.msra.mxu0 %v43
    %165 = vmatprep.subr.mxu0 0.0
    %166 = vmatpush1.msra.mxu0 %v44
    %167 = vmatprep.subr.mxu0 0.0
    %168 = vmatpush1.msra.mxu0 %v45
    %169 = vmatprep.subr.mxu0 0.0
    %170 = vmatpush1.msra.mxu0 %v46
    %171 = vmatprep.subr.mxu0 0.0
    %172 = vmatpush1.msra.mxu0 0.0
    %173 = vmatprep.subr.mxu0 0.0
    %174 = vmatpush1.msra.mxu0 0.0
    %175 = vmatprep.subr.mxu0 0.0
    %176 = vmatpush1.msra.mxu0 0.0
    %177 = vmatprep.subr.mxu0 0.0
    %178 = vmatpush1.msra.mxu0 0.0
    %179 = vmatprep.subr.mxu0 0.0
    %180 = vmatpush1.msra.mxu0 0.0
    %181 = vmatprep.subr.mxu0 0.0
    %182 = vmatpush1.msra.mxu0 0.0
    %183 = vmatprep.subr.mxu0 0.0
    %184 = vmatpush1.msra.mxu0 0.0
    %185 = vmatprep.subr.mxu0 0.0
    %186 = vmatpush1.msra.mxu0 0.0
    %187 = vmatprep.subr.mxu0 0.0
    %188 = vmatpush1.msra.mxu0 0.0
    %189 = vmatprep.subr.mxu0 0.0
    %190 = vmatpush1.msra.mxu0 0.0
    %191 = vmatprep.subr.mxu0 0.0
    %192 = vmatpush1.msra.mxu0 0.0
    %193 = vmatprep.subr.mxu0 0.0
    %194 = vmatpush1.msra.mxu0 0.0
    %195 = vmatprep.subr.mxu0 0.0
    %196 = vmatpush1.msra.mxu0 0.0
    %197 = vmatprep.subr.mxu0 0.0
    %198 = vmatpush1.msra.mxu0 0.0
    %199 = vmatprep.subr.mxu0 0.0
    %200 = vmatpush1.msra.mxu0 0.0
    %201 = vmatprep.subr.mxu0 0.0
    %202 = vmatpush1.msra.mxu0 0.0
    %203 = vmatprep.subr.mxu0 0.0
    %204 = vmatpush1.msra.mxu0 0.0
    %205 = vmatprep.subr.mxu0 0.0
    %206 = vmatpush1.msra.mxu0 0.0
    %207 = vmatprep.subr.mxu0 0.0
    %208 = vmatpush1.msra.mxu0 0.0
    %209 = vmatprep.subr.mxu0 0.0
    %210 = vmatpush1.msra.mxu0 0.0
    %211 = vmatprep.subr.mxu0 0.0
    %212 = vmatpush1.msra.mxu0 0.0
    %213 = vmatprep.subr.mxu0 0.0
    %214 = vmatpush1.msra.mxu0 0.0
    %215 = vmatprep.subr.mxu0 0.0
    %216 = vmatpush1.msra.mxu0 0.0
    %217 = vmatprep.subr.mxu0 0.0
    %218 = vmatpush1.msra.mxu0 0.0
    %219 = vmatprep.subr.mxu0 0.0
    %220 = vmatpush1.msra.mxu0 0.0
    %221 = vmatprep.subr.mxu0 0.0
    %222 = vmatpush1.msra.mxu0 0.0
    %223 = vmatprep.subr.mxu0 0.0
    %224 = vmatpush1.msra.mxu0 0.0
    %225 = vmatprep.subr.mxu0 0.0
    %226 = vmatpush1.msra.mxu0 0.0
    %227 = vmatprep.mubr.f32.mxu0 0.0
    %228 = vmatmul.mubr.f32.gmra.mrb[0].mxu0 %v161
    %v229 = vpop.f32.mrb[0].mxu0
    %v230 = vadd.f32 0.0, %v229
    %v231 = vpop.f32.mrb[0].mxu0
    %232 = vdwg.mxu0
    %v233 = vadd.f32 %v160, %v230
    %v234 = vxor.u32 %v233, 2147483648
    %v235 = vmul.f32 %v234, 1.442695
    %v236 = vpow.pop %v235
    %v237 = vadd.f32 %v236, 1.0
    %v238 = vrcp.pop %v237
    %v239 = vmul.f32 1.0, %v238
    %v240 = vtanh.pop %v233
    %v241 = vmul.f32 %v239, %v146
    %243 = vrot.lane.b32.xlu0 %v240, 64
    %v244 = vpop.permute.xlu0 %243
    %v246 = vmul.f32 %v239, %v244
    %248 = vrot.lane.b32.xlu0 %v246, 32
    %v249 = vpop.permute.xlu0 %248
    %v251 = vadd.f32 %v241, %v249
    %v252 = vtanh.pop %v251
    %254 = vrot.lane.b32.xlu0 %v252, 64
    %v255 = vpop.permute.xlu0 %254
    %v257 = vmul.f32 %v239, %v255
    %259 = vrot.lane.b32.xlu0 %v257, 32
    %v260 = vpop.permute.xlu0 %259
    %s262 = scalar_lea.vmem [#allocation2], 2
    %263 = vst.msk [vmem:[%s262] sm:$0x3] %vm157, %v260
    %s264 = scalar_lea.vmem %s0, 4
    %v265 = vld [vmem:[%s264] sm:$0x3]
    %v266 = vsel %vm50, %v260, 0
    %268 = vmatprep.subr.mxu0 0.0
    %269 = vmatpush1.msra.mxu0 %v43
    %270 = vmatprep.subr.mxu0 0.0
    %271 = vmatpush1.msra.mxu0 %v44
    %272 = vmatprep.subr.mxu0 0.0
    %273 = vmatpush1.msra.mxu0 %v45
    %274 = vmatprep.subr.mxu0 0.0
    %275 = vmatpush1.msra.mxu0 %v46
    %276 = vmatprep.subr.mxu0 0.0
    %277 = vmatpush1.msra.mxu0 0.0
    %278 = vmatprep.subr.mxu0 0.0
    %279 = vmatpush1.msra.mxu0 0.0
    %280 = vmatprep.subr.mxu0 0.0
    %281 = vmatpush1.msra.mxu0 0.0
    %282 = vmatprep.subr.mxu0 0.0
    %283 = vmatpush1.msra.mxu0 0.0
    %284 = vmatprep.subr.mxu0 0.0
    %285 = vmatpush1.msra.mxu0 0.0
    %286 = vmatprep.subr.mxu0 0.0
    %287 = vmatpush1.msra.mxu0 0.0
    %288 = vmatprep.subr.mxu0 0.0
    %289 = vmatpush1.msra.mxu0 0.0
    %290 = vmatprep.subr.mxu0 0.0
    %291 = vmatpush1.msra.mxu0 0.0
    %292 = vmatprep.subr.mxu0 0.0
    %293 = vmatpush1.msra.mxu0 0.0
    %294 = vmatprep.subr.mxu0 0.0
    %295 = vmatpush1.msra.mxu0 0.0
    %296 = vmatprep.subr.mxu0 0.0
    %297 = vmatpush1.msra.mxu0 0.0
    %298 = vmatprep.subr.mxu0 0.0
    %299 = vmatpush1.msra.mxu0 0.0
    %300 = vmatprep.subr.mxu0 0.0
    %301 = vmatpush1.msra.mxu0 0.0
    %302 = vmatprep.subr.mxu0 0.0
    %303 = vmatpush1.msra.mxu0 0.0
    %304 = vmatprep.subr.mxu0 0.0
    %305 = vmatpush1.msra.mxu0 0.0
    %306 = vmatprep.subr.mxu0 0.0
    %307 = vmatpush1.msra.mxu0 0.0
    %308 = vmatprep.subr.mxu0 0.0
    %309 = vmatpush1.msra.mxu0 0.0
    %310 = vmatprep.subr.mxu0 0.0
    %311 = vmatpush1.msra.mxu0 0.0
    %312 = vmatprep.subr.mxu0 0.0
    %313 = vmatpush1.msra.mxu0 0.0
    %314 = vmatprep.subr.mxu0 0.0
    %315 = vmatpush1.msra.mxu0 0.0
    %316 = vmatprep.subr.mxu0 0.0
    %317 = vmatpush1.msra.mxu0 0.0
    %318 = vmatprep.subr.mxu0 0.0
    %319 = vmatpush1.msra.mxu0 0.0
    %320 = vmatprep.subr.mxu0 0.0
    %321 = vmatpush1.msra.mxu0 0.0
    %322 = vmatprep.subr.mxu0 0.0
    %323 = vmatpush1.msra.mxu0 0.0
    %324 = vmatprep.subr.mxu0 0.0
    %325 = vmatpush1.msra.mxu0 0.0
    %326 = vmatprep.subr.mxu0 0.0
    %327 = vmatpush1.msra.mxu0 0.0
    %328 = vmatprep.subr.mxu0 0.0
    %329 = vmatpush1.msra.mxu0 0.0
    %330 = vmatprep.subr.mxu0 0.0
    %331 = vmatpush1.msra.mxu0 0.0
    %332 = vmatprep.mubr.f32.mxu0 0.0
    %333 = vmatmul.mubr.f32.gmra.mrb[0].mxu0 %v266
    %v334 = vpop.f32.mrb[0].mxu0
    %v335 = vadd.f32 0.0, %v334
    %v336 = vpop.f32.mrb[0].mxu0
    %337 = vdwg.mxu0
    %v338 = vadd.f32 %v265, %v335
    %v339 = vxor.u32 %v338, 2147483648
    %v340 = vmul.f32 %v339, 1.442695
    %v341 = vpow.pop %v340
    %v342 = vadd.f32 %v341, 1.0
    %v343 = vrcp.pop %v342
    %v344 = vmul.f32 1.0, %v343
    %v345 = vtanh.pop %v338
    %v346 = vmul.f32 %v344, %v251
    %348 = vrot.lane.b32.xlu0 %v345, 64
    %v349 = vpop.permute.xlu0 %348
    %v351 = vmul.f32 %v344, %v349
    %353 = vrot.lane.b32.xlu0 %v351, 32
    %v354 = vpop.permute.xlu0 %353
    %v356 = vadd.f32 %v346, %v354
    %v357 = vtanh.pop %v356
    %359 = vrot.lane.b32.xlu0 %v357, 64
    %v360 = vpop.permute.xlu0 %359
    %v362 = vmul.f32 %v344, %v360
    %364 = vrot.lane.b32.xlu0 %v362, 32
    %v365 = vpop.permute.xlu0 %364
    %s367 = scalar_lea.vmem [#allocation2], 4
    %368 = vst.msk [vmem:[%s367] sm:$0x3] %vm157, %v365
    %s369 = scalar_lea.vmem %s0, 6
    %v370 = vld [vmem:[%s369] sm:$0x3]
    %v371 = vsel %vm50, %v365, 0
    %373 = vmatprep.subr.mxu0 0.0
    %374 = vmatpush1.msra.mxu0 %v43
    %375 = vmatprep.subr.mxu0 0.0
    %376 = vmatpush1.msra.mxu0 %v44
    %377 = vmatprep.subr.mxu0 0.0
    %378 = vmatpush1.msra.mxu0 %v45
    %379 = vmatprep.subr.mxu0 0.0
    %380 = vmatpush1.msra.mxu0 %v46
    %381 = vmatprep.subr.mxu0 0.0
    %382 = vmatpush1.msra.mxu0 0.0
    %383 = vmatprep.subr.mxu0 0.0
    %384 = vmatpush1.msra.mxu0 0.0
    %385 = vmatprep.subr.mxu0 0.0
    %386 = vmatpush1.msra.mxu0 0.0
    %387 = vmatprep.subr.mxu0 0.0
    %388 = vmatpush1.msra.mxu0 0.0
    %389 = vmatprep.subr.mxu0 0.0
    %390 = vmatpush1.msra.mxu0 0.0
    %391 = vmatprep.subr.mxu0 0.0
    %392 = vmatpush1.msra.mxu0 0.0
    %393 = vmatprep.subr.mxu0 0.0
    %394 = vmatpush1.msra.mxu0 0.0
    %395 = vmatprep.subr.mxu0 0.0
    %396 = vmatpush1.msra.mxu0 0.0
    %397 = vmatprep.subr.mxu0 0.0
    %398 = vmatpush1.msra.mxu0 0.0
    %399 = vmatprep.subr.mxu0 0.0
    %400 = vmatpush1.msra.mxu0 0.0
    %401 = vmatprep.subr.mxu0 0.0
    %402 = vmatpush1.msra.mxu0 0.0
    %403 = vmatprep.subr.mxu0 0.0
    %404 = vmatpush1.msra.mxu0 0.0
    %405 = vmatprep.subr.mxu0 0.0
    %406 = vmatpush1.msra.mxu0 0.0
    %407 = vmatprep.subr.mxu0 0.0
    %408 = vmatpush1.msra.mxu0 0.0
    %409 = vmatprep.subr.mxu0 0.0
    %410 = vmatpush1.msra.mxu0 0.0
    %411 = vmatprep.subr.mxu0 0.0
    %412 = vmatpush1.msra.mxu0 0.0
    %413 = vmatprep.subr.mxu0 0.0
    %414 = vmatpush1.msra.mxu0 0.0
    %415 = vmatprep.subr.mxu0 0.0
    %416 = vmatpush1.msra.mxu0 0.0
    %417 = vmatprep.subr.mxu0 0.0
    %418 = vmatpush1.msra.mxu0 0.0
    %419 = vmatprep.subr.mxu0 0.0
    %420 = vmatpush1.msra.mxu0 0.0
    %421 = vmatprep.subr.mxu0 0.0
    %422 = vmatpush1.msra.mxu0 0.0
    %423 = vmatprep.subr.mxu0 0.0
    %424 = vmatpush1.msra.mxu0 0.0
    %425 = vmatprep.subr.mxu0 0.0
    %426 = vmatpush1.msra.mxu0 0.0
    %427 = vmatprep.subr.mxu0 0.0
    %428 = vmatpush1.msra.mxu0 0.0
    %429 = vmatprep.subr.mxu0 0.0
    %430 = vmatpush1.msra.mxu0 0.0
    %431 = vmatprep.subr.mxu0 0.0
    %432 = vmatpush1.msra.mxu0 0.0
    %433 = vmatprep.subr.mxu0 0.0
    %434 = vmatpush1.msra.mxu0 0.0
    %435 = vmatprep.subr.mxu0 0.0
    %436 = vmatpush1.msra.mxu0 0.0
    %437 = vmatprep.mubr.f32.mxu0 0.0
    %438 = vmatmul.mubr.f32.gmra.mrb[0].mxu0 %v371
    %v439 = vpop.f32.mrb[0].mxu0
    %v440 = vadd.f32 0.0, %v439
    %v441 = vpop.f32.mrb[0].mxu0
    %442 = vdwg.mxu0
    %v443 = vadd.f32 %v370, %v440
    %v444 = vxor.u32 %v443, 2147483648
    %v445 = vmul.f32 %v444, 1.442695
    %v446 = vpow.pop %v445
    %v447 = vadd.f32 %v446, 1.0
    %v448 = vrcp.pop %v447
    %v449 = vmul.f32 1.0, %v448
    %v450 = vtanh.pop %v443
    %v451 = vmul.f32 %v449, %v356
    %453 = vrot.lane.b32.xlu0 %v450, 64
    %v454 = vpop.permute.xlu0 %453
    %v456 = vmul.f32 %v449, %v454
    %458 = vrot.lane.b32.xlu0 %v456, 32
    %v459 = vpop.permute.xlu0 %458
    %v461 = vadd.f32 %v451, %v459
    %v462 = vtanh.pop %v461
    %464 = vrot.lane.b32.xlu0 %v462, 64
    %v465 = vpop.permute.xlu0 %464
    %v467 = vmul.f32 %v449, %v465
    %469 = vrot.lane.b32.xlu0 %v467, 32
    %v470 = vpop.permute.xlu0 %469
    %s472 = scalar_lea.vmem [#allocation2], 6
    %473 = vst.msk [vmem:[%s472] sm:$0x3] %vm157, %v470
    %s474 = scalar_lea.vmem %s0, 8
    %v475 = vld [vmem:[%s474] sm:$0x3]
    %v476 = vsel %vm50, %v470, 0
    %478 = vmatprep.subr.mxu0 0.0
    %479 = vmatpush1.msra.mxu0 %v43
    %480 = vmatprep.subr.mxu0 0.0
    %481 = vmatpush1.msra.mxu0 %v44
    %482 = vmatprep.subr.mxu0 0.0
    %483 = vmatpush1.msra.mxu0 %v45
    %484 = vmatprep.subr.mxu0 0.0
    %485 = vmatpush1.msra.mxu0 %v46
    %486 = vmatprep.subr.mxu0 0.0
    %487 = vmatpush1.msra.mxu0 0.0
    %488 = vmatprep.subr.mxu0 0.0
    %489 = vmatpush1.msra.mxu0 0.0
    %490 = vmatprep.subr.mxu0 0.0
    %491 = vmatpush1.msra.mxu0 0.0
    %492 = vmatprep.subr.mxu0 0.0
    %493 = vmatpush1.msra.mxu0 0.0
    %494 = vmatprep.subr.mxu0 0.0
    %495 = vmatpush1.msra.mxu0 0.0
    %496 = vmatprep.subr.mxu0 0.0
    %497 = vmatpush1.msra.mxu0 0.0
    %498 = vmatprep.subr.mxu0 0.0
    %499 = vmatpush1.msra.mxu0 0.0
    %500 = vmatprep.subr.mxu0 0.0
    %501 = vmatpush1.msra.mxu0 0.0
    %502 = vmatprep.subr.mxu0 0.0
    %503 = vmatpush1.msra.mxu0 0.0
    %504 = vmatprep.subr.mxu0 0.0
    %505 = vmatpush1.msra.mxu0 0.0
    %506 = vmatprep.subr.mxu0 0.0
    %507 = vmatpush1.msra.mxu0 0.0
    %508 = vmatprep.subr.mxu0 0.0
    %509 = vmatpush1.msra.mxu0 0.0
    %510 = vmatprep.subr.mxu0 0.0
    %511 = vmatpush1.msra.mxu0 0.0
    %512 = vmatprep.subr.mxu0 0.0
    %513 = vmatpush1.msra.mxu0 0.0
    %514 = vmatprep.subr.mxu0 0.0
    %515 = vmatpush1.msra.mxu0 0.0
    %516 = vmatprep.subr.mxu0 0.0
    %517 = vmatpush1.msra.mxu0 0.0
    %518 = vmatprep.subr.mxu0 0.0
    %519 = vmatpush1.msra.mxu0 0.0
    %520 = vmatprep.subr.mxu0 0.0
    %521 = vmatpush1.msra.mxu0 0.0
    %522 = vmatprep.subr.mxu0 0.0
    %523 = vmatpush1.msra.mxu0 0.0
    %524 = vmatprep.subr.mxu0 0.0
    %525 = vmatpush1.msra.mxu0 0.0
    %526 = vmatprep.subr.mxu0 0.0
    %527 = vmatpush1.msra.mxu0 0.0
    %528 = vmatprep.subr.mxu0 0.0
    %529 = vmatpush1.msra.mxu0 0.0
    %530 = vmatprep.subr.mxu0 0.0
    %531 = vmatpush1.msra.mxu0 0.0
    %532 = vmatprep.subr.mxu0 0.0
    %533 = vmatpush1.msra.mxu0 0.0
    %534 = vmatprep.subr.mxu0 0.0
    %535 = vmatpush1.msra.mxu0 0.0
    %536 = vmatprep.subr.mxu0 0.0
    %537 = vmatpush1.msra.mxu0 0.0
    %538 = vmatprep.subr.mxu0 0.0
    %539 = vmatpush1.msra.mxu0 0.0
    %540 = vmatprep.subr.mxu0 0.0
    %541 = vmatpush1.msra.mxu0 0.0
    %542 = vmatprep.mubr.f32.mxu0 0.0
    %543 = vmatmul.mubr.f32.gmra.mrb[0].mxu0 %v476
    %v544 = vpop.f32.mrb[0].mxu0
    %v545 = vadd.f32 0.0, %v544
    %v546 = vpop.f32.mrb[0].mxu0
    %547 = vdwg.mxu0
    %v548 = vadd.f32 %v475, %v545
    %v549 = vxor.u32 %v548, 2147483648
    %v550 = vmul.f32 %v549, 1.442695
    %v551 = vpow.pop %v550
    %v552 = vadd.f32 %v551, 1.0
    %v553 = vrcp.pop %v552
    %v554 = vmul.f32 1.0, %v553
    %v555 = vtanh.pop %v548
    %v556 = vmul.f32 %v554, %v461
    %558 = vrot.lane.b32.xlu0 %v555, 64
    %v559 = vpop.permute.xlu0 %558
    %v561 = vmul.f32 %v554, %v559
    %563 = vrot.lane.b32.xlu0 %v561, 32
    %v564 = vpop.permute.xlu0 %563
    %v566 = vadd.f32 %v556, %v564
    %v567 = vtanh.pop %v566
    %569 = vrot.lane.b32.xlu0 %v567, 64
    %v570 = vpop.permute.xlu0 %569
    %v572 = vmul.f32 %v554, %v570
    %574 = vrot.lane.b32.xlu0 %v572, 32
    %v575 = vpop.permute.xlu0 %574
    %s577 = scalar_lea.vmem [#allocation2], 8
    %578 = vst.msk [vmem:[%s577] sm:$0x3] %vm157, %v575
    %s579 = scalar_lea.vmem %s0, 10
    %v580 = vld [vmem:[%s579] sm:$0x3]
    %v581 = vsel %vm50, %v575, 0
    %583 = vmatprep.subr.mxu0 0.0
    %584 = vmatpush1.msra.mxu0 %v43
    %585 = vmatprep.subr.mxu0 0.0
    %586 = vmatpush1.msra.mxu0 %v44
    %587 = vmatprep.subr.mxu0 0.0
    %588 = vmatpush1.msra.mxu0 %v45
    %589 = vmatprep.subr.mxu0 0.0
    %590 = vmatpush1.msra.mxu0 %v46
    %591 = vmatprep.subr.mxu0 0.0
    %592 = vmatpush1.msra.mxu0 0.0
    %593 = vmatprep.subr.mxu0 0.0
    %594 = vmatpush1.msra.mxu0 0.0
    %595 = vmatprep.subr.mxu0 0.0
    %596 = vmatpush1.msra.mxu0 0.0
    %597 = vmatprep.subr.mxu0 0.0
    %598 = vmatpush1.msra.mxu0 0.0
    %599 = vmatprep.subr.mxu0 0.0
    %600 = vmatpush1.msra.mxu0 0.0
    %601 = vmatprep.subr.mxu0 0.0
    %602 = vmatpush1.msra.mxu0 0.0
    %603 = vmatprep.subr.mxu0 0.0
    %604 = vmatpush1.msra.mxu0 0.0
    %605 = vmatprep.subr.mxu0 0.0
    %606 = vmatpush1.msra.mxu0 0.0
    %607 = vmatprep.subr.mxu0 0.0
    %608 = vmatpush1.msra.mxu0 0.0
    %609 = vmatprep.subr.mxu0 0.0
    %610 = vmatpush1.msra.mxu0 0.0
    %611 = vmatprep.subr.mxu0 0.0
    %612 = vmatpush1.msra.mxu0 0.0
    %613 = vmatprep.subr.mxu0 0.0
    %614 = vmatpush1.msra.mxu0 0.0
    %615 = vmatprep.subr.mxu0 0.0
    %616 = vmatpush1.msra.mxu0 0.0
    %617 = vmatprep.subr.mxu0 0.0
    %618 = vmatpush1.msra.mxu0 0.0
    %619 = vmatprep.subr.mxu0 0.0
    %620 = vmatpush1.msra.mxu0 0.0
    %621 = vmatprep.subr.mxu0 0.0
    %622 = vmatpush1.msra.mxu0 0.0
    %623 = vmatprep.subr.mxu0 0.0
    %624 = vmatpush1.msra.mxu0 0.0
    %625 = vmatprep.subr.mxu0 0.0
    %626 = vmatpush1.msra.mxu0 0.0
    %627 = vmatprep.subr.mxu0 0.0
    %628 = vmatpush1.msra.mxu0 0.0
    %629 = vmatprep.subr.mxu0 0.0
    %630 = vmatpush1.msra.mxu0 0.0
    %631 = vmatprep.subr.mxu0 0.0
    %632 = vmatpush1.msra.mxu0 0.0
    %633 = vmatprep.subr.mxu0 0.0
    %634 = vmatpush1.msra.mxu0 0.0
    %635 = vmatprep.subr.mxu0 0.0
    %636 = vmatpush1.msra.mxu0 0.0
    %637 = vmatprep.subr.mxu0 0.0
    %638 = vmatpush1.msra.mxu0 0.0
    %639 = vmatprep.subr.mxu0 0.0
    %640 = vmatpush1.msra.mxu0 0.0
    %641 = vmatprep.subr.mxu0 0.0
    %642 = vmatpush1.msra.mxu0 0.0
    %643 = vmatprep.subr.mxu0 0.0
    %644 = vmatpush1.msra.mxu0 0.0
    %645 = vmatprep.subr.mxu0 0.0
    %646 = vmatpush1.msra.mxu0 0.0
    %647 = vmatprep.mubr.f32.mxu0 0.0
    %648 = vmatmul.mubr.f32.gmra.mrb[0].mxu0 %v581
    %v649 = vpop.f32.mrb[0].mxu0
    %v650 = vadd.f32 0.0, %v649
    %v651 = vpop.f32.mrb[0].mxu0
    %652 = vdwg.mxu0
    %v653 = vadd.f32 %v580, %v650
    %v654 = vxor.u32 %v653, 2147483648
    %v655 = vmul.f32 %v654, 1.442695
    %v656 = vpow.pop %v655
    %v657 = vadd.f32 %v656, 1.0
    %v658 = vrcp.pop %v657
    %v659 = vmul.f32 1.0, %v658
    %v660 = vtanh.pop %v653
    %v661 = vmul.f32 %v659, %v566
    %663 = vrot.lane.b32.xlu0 %v660, 64
    %v664 = vpop.permute.xlu0 %663
    %v666 = vmul.f32 %v659, %v664
    %668 = vrot.lane.b32.xlu0 %v666, 32
    %v669 = vpop.permute.xlu0 %668
    %v671 = vadd.f32 %v661, %v669
    %v672 = vtanh.pop %v671
    %674 = vrot.lane.b32.xlu0 %v672, 64
    %v675 = vpop.permute.xlu0 %674
    %v677 = vmul.f32 %v659, %v675
    %679 = vrot.lane.b32.xlu0 %v677, 32
    %v680 = vpop.permute.xlu0 %679
    %s682 = scalar_lea.vmem [#allocation2], 10
    %683 = vst.msk [vmem:[%s682] sm:$0x3] %vm157, %v680
    %684 = vst.msk [vmem:[#allocation4] sm:$0x3] %vm157, %v680
    %686 = vrot.lane.b32.xlu0 %v671, 96
    %v687 = vpop.permute.xlu0 %686
    %689 = vst.msk [vmem:[#allocation6] sm:$0x3] %vm157, %v687
    %v690 = vld [vmem:[#allocation2] sm:$0x3]
    %v691 = vld [vmem:[#allocation2 + $0x2] sm:$0x3]
    %v692 = vld [vmem:[#allocation2 + $0x4] sm:$0x3]
    %v693 = vld [vmem:[#allocation2 + $0x6] sm:$0x3]
    %v694 = vld [vmem:[#allocation2 + $0x8] sm:$0x3]
    %v695 = vld [vmem:[#allocation2 + $0xa] sm:$0x3]
    %v696 = vld [vmem:[%s6] sm:$0xff]
    %v697 = vld [vmem:[%s6 + $0x8] sm:$0xff]
    %v698 = vld [vmem:[%s6 + $0x10] sm:$0xff]
    %v699 = vld [vmem:[%s6 + $0x18] sm:$0xff]
    %v706 = vcombine.low %v690, %v691
    %v707 = vcombine.low %v692, %v693
    %v709 = vunpack.c.l.s4 1983009808
    %v710 = vunpack.c.0.s8 %v709
    %v711 = vlaneseq
    %v712 = vshrl.u32 %v711, 7
    %v713 = vsub.s32 %v710, %v712
    %v714 = vrot.slane %v706, %v713
    %v716 = vunpack.c.l.s4 1983009808
    %v717 = vunpack.c.0.s8 %v716
    %v718 = vlaneseq
    %v719 = vshrl.u32 %v718, 7
    %v720 = vsub.s32 %v717, %v719
    %v721 = vrot.slane %v707, %v720
    %v722 = vcombine.low %v714, %v721
    %v723 = vcombine.low %v694, %v695
    %v725 = vunpack.c.l.s4 1983009808
    %v726 = vunpack.c.0.s8 %v725
    %v727 = vlaneseq
    %v728 = vshrl.u32 %v727, 7
    %v729 = vsub.s32 %v726, %v728
    %v730 = vrot.slane %v723, %v729
    %v731 = vsel %vm50, %v722, 0
    %v733 = vsel %vm50, %v730, 0
    %735 = vmatprep.subr.mxu0 0.0
    %736 = vmatpush1.msra.mxu0 %v696
    %737 = vmatprep.subr.mxu0 0.0
    %738 = vmatpush1.msra.mxu0 %v697
    %739 = vmatprep.subr.mxu0 0.0
    %740 = vmatpush1.msra.mxu0 %v698
    %741 = vmatprep.subr.mxu0 0.0
    %742 = vmatpush1.msra.mxu0 %v699
    %743 = vmatprep.subr.mxu0 0.0
    %744 = vmatpush1.msra.mxu0 0.0
    %745 = vmatprep.subr.mxu0 0.0
    %746 = vmatpush1.msra.mxu0 0.0
    %747 = vmatprep.subr.mxu0 0.0
    %748 = vmatpush1.msra.mxu0 0.0
    %749 = vmatprep.subr.mxu0 0.0
    %750 = vmatpush1.msra.mxu0 0.0
    %751 = vmatprep.subr.mxu0 0.0
    %752 = vmatpush1.msra.mxu0 0.0
    %753 = vmatprep.subr.mxu0 0.0
    %754 = vmatpush1.msra.mxu0 0.0
    %755 = vmatprep.subr.mxu0 0.0
    %756 = vmatpush1.msra.mxu0 0.0
    %757 = vmatprep.subr.mxu0 0.0
    %758 = vmatpush1.msra.mxu0 0.0
    %759 = vmatprep.subr.mxu0 0.0
    %760 = vmatpush1.msra.mxu0 0.0
    %761 = vmatprep.subr.mxu0 0.0
    %762 = vmatpush1.msra.mxu0 0.0
    %763 = vmatprep.subr.mxu0 0.0
    %764 = vmatpush1.msra.mxu0 0.0
    %765 = vmatprep.subr.mxu0 0.0
    %766 = vmatpush1.msra.mxu0 0.0
    %767 = vmatprep.subr.mxu0 0.0
    %768 = vmatpush1.msra.mxu0 0.0
    %769 = vmatprep.subr.mxu0 0.0
    %770 = vmatpush1.msra.mxu0 0.0
    %771 = vmatprep.subr.mxu0 0.0
    %772 = vmatpush1.msra.mxu0 0.0
    %773 = vmatprep.subr.mxu0 0.0
    %774 = vmatpush1.msra.mxu0 0.0
    %775 = vmatprep.subr.mxu0 0.0
    %776 = vmatpush1.msra.mxu0 0.0
    %777 = vmatprep.subr.mxu0 0.0
    %778 = vmatpush1.msra.mxu0 0.0
    %779 = vmatprep.subr.mxu0 0.0
    %780 = vmatpush1.msra.mxu0 0.0
    %781 = vmatprep.subr.mxu0 0.0
    %782 = vmatpush1.msra.mxu0 0.0
    %783 = vmatprep.subr.mxu0 0.0
    %784 = vmatpush1.msra.mxu0 0.0
    %785 = vmatprep.subr.mxu0 0.0
    %786 = vmatpush1.msra.mxu0 0.0
    %787 = vmatprep.subr.mxu0 0.0
    %788 = vmatpush1.msra.mxu0 0.0
    %789 = vmatprep.subr.mxu0 0.0
    %790 = vmatpush1.msra.mxu0 0.0
    %791 = vmatprep.subr.mxu0 0.0
    %792 = vmatpush1.msra.mxu0 0.0
    %793 = vmatprep.subr.mxu0 0.0
    %794 = vmatpush1.msra.mxu0 0.0
    %795 = vmatprep.subr.mxu0 0.0
    %796 = vmatpush1.msra.mxu0 0.0
    %797 = vmatprep.subr.mxu0 0.0
    %798 = vmatpush1.msra.mxu0 0.0
    %799 = vmatprep.mubr.f32.mxu0 0.0
    %800 = vmatmul.mubr.f32.gmra.mrb[0].mxu0 %v731
    %v801 = vpop.f32.mrb[0].mxu0
    %v802 = vadd.f32 0.0, %v801
    %v803 = vpop.f32.mrb[0].mxu0
    %804 = vmatprep.mubr.f32.mxu0 0.0
    %805 = vmatmul.mubr.f32.gmra.mrb[0].mxu0 %v733
    %v806 = vpop.f32.mrb[0].mxu0
    %v807 = vadd.f32 0.0, %v806
    %v808 = vpop.f32.mrb[0].mxu0
    %809 = vdwg.mxu0
    %v810 = vld [vmem:[%s4] sm:$0xff]
    %v811 = vld [vmem:[%s4 + $0x8] sm:$0xff]
    %v812 = vld [vmem:[%s7] sm:$0xff]
    %v813 = vld [vmem:[%s7 + $0x8] sm:$0xff]
    %v814 = vld [vmem:[%s7 + $0x10] sm:$0xff]
    %v815 = vld [vmem:[%s7 + $0x18] sm:$0xff]
    %v817 = vsel %vm50, %v810, 0
    %v820 = vsel %vm50, %v811, 0
    %822 = vmatprep.subr.mxu0 0.0
    %823 = vmatpush1.msra.mxu0 %v812
    %824 = vmatprep.subr.mxu0 0.0
    %825 = vmatpush1.msra.mxu0 %v813
    %826 = vmatprep.subr.mxu0 0.0
    %827 = vmatpush1.msra.mxu0 %v814
    %828 = vmatprep.subr.mxu0 0.0
    %829 = vmatpush1.msra.mxu0 %v815
    %830 = vmatprep.subr.mxu0 0.0
    %831 = vmatpush1.msra.mxu0 0.0
    %832 = vmatprep.subr.mxu0 0.0
    %833 = vmatpush1.msra.mxu0 0.0
    %834 = vmatprep.subr.mxu0 0.0
    %835 = vmatpush1.msra.mxu0 0.0
    %836 = vmatprep.subr.mxu0 0.0
    %837 = vmatpush1.msra.mxu0 0.0
    %838 = vmatprep.subr.mxu0 0.0
    %839 = vmatpush1.msra.mxu0 0.0
    %840 = vmatprep.subr.mxu0 0.0
    %841 = vmatpush1.msra.mxu0 0.0
    %842 = vmatprep.subr.mxu0 0.0
    %843 = vmatpush1.msra.mxu0 0.0
    %844 = vmatprep.subr.mxu0 0.0
    %845 = vmatpush1.msra.mxu0 0.0
    %846 = vmatprep.subr.mxu0 0.0
    %847 = vmatpush1.msra.mxu0 0.0
    %848 = vmatprep.subr.mxu0 0.0
    %849 = vmatpush1.msra.mxu0 0.0
    %850 = vmatprep.subr.mxu0 0.0
    %851 = vmatpush1.msra.mxu0 0.0
    %852 = vmatprep.subr.mxu0 0.0
    %853 = vmatpush1.msra.mxu0 0.0
    %854 = vmatprep.subr.mxu0 0.0
    %855 = vmatpush1.msra.mxu0 0.0
    %856 = vmatprep.subr.mxu0 0.0
    %857 = vmatpush1.msra.mxu0 0.0
    %858 = vmatprep.subr.mxu0 0.0
    %859 = vmatpush1.msra.mxu0 0.0
    %860 = vmatprep.subr.mxu0 0.0
    %861 = vmatpush1.msra.mxu0 0.0
    %862 = vmatprep.subr.mxu0 0.0
    %863 = vmatpush1.msra.mxu0 0.0
    %864 = vmatprep.subr.mxu0 0.0
    %865 = vmatpush1.msra.mxu0 0.0
    %866 = vmatprep.subr.mxu0 0.0
    %867 = vmatpush1.msra.mxu0 0.0
    %868 = vmatprep.subr.mxu0 0.0
    %869 = vmatpush1.msra.mxu0 0.0
    %870 = vmatprep.subr.mxu0 0.0
    %871 = vmatpush1.msra.mxu0 0.0
    %872 = vmatprep.subr.mxu0 0.0
    %873 = vmatpush1.msra.mxu0 0.0
    %874 = vmatprep.subr.mxu0 0.0
    %875 = vmatpush1.msra.mxu0 0.0
    %876 = vmatprep.subr.mxu0 0.0
    %877 = vmatpush1.msra.mxu0 0.0
    %878 = vmatprep.subr.mxu0 0.0
    %879 = vmatpush1.msra.mxu0 0.0
    %880 = vmatprep.subr.mxu0 0.0
    %881 = vmatpush1.msra.mxu0 0.0
    %882 = vmatprep.subr.mxu0 0.0
    %883 = vmatpush1.msra.mxu0 0.0
    %884 = vmatprep.subr.mxu0 0.0
    %885 = vmatpush1.msra.mxu0 0.0
    %886 = vmatprep.mubr.f32.mxu0 0.0
    %887 = vmatmul.mubr.f32.gmra.mrb[0].mxu0 %v817
    %v888 = vpop.f32.mrb[0].mxu0
    %v889 = vadd.f32 0.0, %v888
    %v890 = vpop.f32.mrb[0].mxu0
    %891 = vmatprep.mubr.f32.mxu0 0.0
    %892 = vmatmul.mubr.f32.gmra.mrb[0].mxu0 %v820
    %v893 = vpop.f32.mrb[0].mxu0
    %v894 = vadd.f32 0.0, %v893
    %v895 = vpop.f32.mrb[0].mxu0
    %896 = vdwg.mxu0
    %v899 = vcombine.high %v802, %v802
    %v901 = vunpack.c.l.s4 1966171168
    %v902 = vunpack.c.0.s8 %v901
    %v903 = vlaneseq
    %v904 = vshrl.u32 %v903, 7
    %v905 = vsub.s32 %v902, %v904
    %v906 = vrot.slane %v802, %v905
    %v908 = vunpack.c.l.s4 1966171168
    %v909 = vunpack.c.0.s8 %v908
    %v910 = vlaneseq
    %v911 = vshrl.u32 %v910, 7
    %v912 = vsub.s32 %v909, %v911
    %v913 = vrot.slane %v899, %v912
    %v914 = vcombine.high %v906, %v906
    %v915 = vcombine.high %v913, %v913
    %v917 = vunpack.c.l.s4 1966171168
    %v918 = vunpack.c.0.s8 %v917
    %v919 = vlaneseq
    %v920 = vshrl.u32 %v919, 7
    %v921 = vsub.s32 %v918, %v920
    %v922 = vrot.slane %v906, %v921
    %v924 = vunpack.c.l.s4 1966171168
    %v925 = vunpack.c.0.s8 %v924
    %v926 = vlaneseq
    %v927 = vshrl.u32 %v926, 7
    %v928 = vsub.s32 %v925, %v927
    %v929 = vrot.slane %v913, %v928
    %v931 = vunpack.c.l.s4 1966171168
    %v932 = vunpack.c.0.s8 %v931
    %v933 = vlaneseq
    %v934 = vshrl.u32 %v933, 7
    %v935 = vsub.s32 %v932, %v934
    %v936 = vrot.slane %v914, %v935
    %v938 = vunpack.c.l.s4 1966171168
    %v939 = vunpack.c.0.s8 %v938
    %v940 = vlaneseq
    %v941 = vshrl.u32 %v940, 7
    %v942 = vsub.s32 %v939, %v941
    %v943 = vrot.slane %v915, %v942
    %v944 = vcombine.high %v922, %v922
    %v945 = vcombine.high %v929, %v929
    %v946 = vcombine.high %v936, %v936
    %v947 = vcombine.high %v943, %v943
    %v949 = vunpack.c.l.s4 1966171168
    %v950 = vunpack.c.0.s8 %v949
    %v951 = vlaneseq
    %v952 = vshrl.u32 %v951, 7
    %v953 = vsub.s32 %v950, %v952
    %v954 = vrot.slane %v807, %v953
    %v955 = vcombine.high %v954, %v954
    %v957 = vunpack.c.l.s4 1966171168
    %v958 = vunpack.c.0.s8 %v957
    %v959 = vlaneseq
    %v960 = vshrl.u32 %v959, 7
    %v961 = vsub.s32 %v958, %v960
    %v962 = vrot.slane %v954, %v961
    %v964 = vunpack.c.l.s4 1966171168
    %v965 = vunpack.c.0.s8 %v964
    %v966 = vlaneseq
    %v967 = vshrl.u32 %v966, 7
    %v968 = vsub.s32 %v965, %v967
    %v969 = vrot.slane %v955, %v968
    %v970 = vcombine.high %v962, %v962
    %v971 = vcombine.high %v969, %v969
    %v972 = vlaneseq
    %v973 = vshrl.u32 %v972, 7
    %v974 = vsub.s32 0, %v973
    %v975 = vrot.slane %v922, %v974
    %v976 = vlaneseq
    %v977 = vshrl.u32 %v976, 7
    %v978 = vsub.s32 0, %v977
    %v979 = vrot.slane %v936, %v978
    %v980 = vlaneseq
    %v981 = vshrl.u32 %v980, 7
    %v982 = vsub.s32 0, %v981
    %v983 = vrot.slane %v944, %v982
    %v984 = vlaneseq
    %v985 = vshrl.u32 %v984, 7
    %v986 = vsub.s32 0, %v985
    %v987 = vrot.slane %v946, %v986
    %v988 = vlaneseq
    %v989 = vshrl.u32 %v988, 7
    %v990 = vsub.s32 0, %v989
    %v991 = vrot.slane %v929, %v990
    %v992 = vlaneseq
    %v993 = vshrl.u32 %v992, 7
    %v994 = vsub.s32 0, %v993
    %v995 = vrot.slane %v943, %v994
    %v996 = vlaneseq
    %v997 = vshrl.u32 %v996, 7
    %v998 = vsub.s32 0, %v997
    %v999 = vrot.slane %v945, %v998
    %v1000 = vlaneseq
    %v1001 = vshrl.u32 %v1000, 7
    %v1002 = vsub.s32 0, %v1001
    %v1003 = vrot.slane %v947, %v1002
    %v1004 = vlaneseq
    %v1005 = vshrl.u32 %v1004, 7
    %v1006 = vsub.s32 0, %v1005
    %v1007 = vrot.slane %v962, %v1006
    %v1008 = vlaneseq
    %v1009 = vshrl.u32 %v1008, 7
    %v1010 = vsub.s32 0, %v1009
    %v1011 = vrot.slane %v969, %v1010
    %v1012 = vlaneseq
    %v1013 = vshrl.u32 %v1012, 7
    %v1014 = vsub.s32 0, %v1013
    %v1015 = vrot.slane %v970, %v1014
    %v1016 = vlaneseq
    %v1017 = vshrl.u32 %v1016, 7
    %v1018 = vsub.s32 0, %v1017
    %v1019 = vrot.slane %v971, %v1018
    %v1032 = vadd.f32 %v975, %v889
    %v1033 = vadd.f32 %v979, %v894
    %v1034 = vadd.f32 %v983, %v889
    %v1035 = vadd.f32 %v987, %v894
    %v1036 = vadd.f32 %v991, %v889
    %v1037 = vadd.f32 %v995, %v894
    %v1038 = vadd.f32 %v999, %v889
    %v1039 = vadd.f32 %v1003, %v894
    %v1040 = vadd.f32 %v1007, %v889
    %v1041 = vadd.f32 %v1011, %v894
    %v1042 = vadd.f32 %v1015, %v889
    %v1043 = vadd.f32 %v1019, %v894
    %v1044 = vld [vmem:[%s8] sm:$0x1]
    %v1046 = vlaneseq
    %v1047 = vshrl.u32 %v1046, 7
    %v1048 = vsub.s32 0, %v1047
    %v1049 = vrot.slane %v1044, %v1048
    %v1051 = vadd.f32 %v1032, %v1049
    %v1052 = vadd.f32 %v1033, %v1049
    %v1053 = vadd.f32 %v1034, %v1049
    %v1054 = vadd.f32 %v1035, %v1049
    %v1055 = vadd.f32 %v1036, %v1049
    %v1056 = vadd.f32 %v1037, %v1049
    %v1057 = vadd.f32 %v1038, %v1049
    %v1058 = vadd.f32 %v1039, %v1049
    %v1059 = vadd.f32 %v1040, %v1049
    %v1060 = vadd.f32 %v1041, %v1049
    %v1061 = vadd.f32 %v1042, %v1049
    %v1062 = vadd.f32 %v1043, %v1049
    %v1063 = vtanh.pop %v1051
    %v1064 = vtanh.pop %v1052
    %v1065 = vtanh.pop %v1053
    %v1066 = vtanh.pop %v1054
    %v1067 = vtanh.pop %v1055
    %v1068 = vtanh.pop %v1056
    %v1069 = vtanh.pop %v1057
    %v1070 = vtanh.pop %v1058
    %v1071 = vtanh.pop %v1059
    %v1072 = vtanh.pop %v1060
    %v1073 = vtanh.pop %v1061
    %v1074 = vtanh.pop %v1062
    %v1075 = vld [vmem:[%s9] sm:$0x1]
    %v1077 = vlaneseq
    %v1078 = vshrl.u32 %v1077, 7
    %v1079 = vsub.s32 0, %v1078
    %v1080 = vrot.slane %v1075, %v1079
    %v1082 = vmul.f32 %v1063, %v1080
    %v1083 = vmul.f32 %v1064, %v1080
    %v1084 = vmul.f32 %v1065, %v1080
    %v1085 = vmul.f32 %v1066, %v1080
    %v1086 = vmul.f32 %v1067, %v1080
    %v1087 = vmul.f32 %v1068, %v1080
    %v1088 = vmul.f32 %v1069, %v1080
    %v1089 = vmul.f32 %v1070, %v1080
    %v1090 = vmul.f32 %v1071, %v1080
    %v1091 = vmul.f32 %v1072, %v1080
    %v1092 = vmul.f32 %v1073, %v1080
    %v1093 = vmul.f32 %v1074, %v1080
    %v1094 = vsel %vm50, %v1082, 0.0
    %1095 = vadd.xlane.f32.xlu0 %v1094
    %v1096 = vpop.xlane.xlu0 %1095
    %v1097 = vsel %vm50, %v1083, 0.0
    %1098 = vadd.xlane.f32.xlu0 %v1097
    %v1099 = vpop.xlane.xlu0 %1098
    %v1100 = vsel %vm50, %v1084, 0.0
    %1101 = vadd.xlane.f32.xlu0 %v1100
    %v1102 = vpop.xlane.xlu0 %1101
    %v1103 = vsel %vm50, %v1085, 0.0
    %1104 = vadd.xlane.f32.xlu0 %v1103
    %v1105 = vpop.xlane.xlu0 %1104
    %v1106 = vsel %vm50, %v1086, 0.0
    %1107 = vadd.xlane.f32.xlu0 %v1106
    %v1108 = vpop.xlane.xlu0 %1107
    %v1109 = vsel %vm50, %v1087, 0.0
    %1110 = vadd.xlane.f32.xlu0 %v1109
    %v1111 = vpop.xlane.xlu0 %1110
    %v1112 = vsel %vm50, %v1088, 0.0
    %1113 = vadd.xlane.f32.xlu0 %v1112
    %v1114 = vpop.xlane.xlu0 %1113
    %v1115 = vsel %vm50, %v1089, 0.0
    %1116 = vadd.xlane.f32.xlu0 %v1115
    %v1117 = vpop.xlane.xlu0 %1116
    %v1118 = vsel %vm50, %v1090, 0.0
    %1119 = vadd.xlane.f32.xlu0 %v1118
    %v1120 = vpop.xlane.xlu0 %1119
    %v1121 = vsel %vm50, %v1091, 0.0
    %1122 = vadd.xlane.f32.xlu0 %v1121
    %v1123 = vpop.xlane.xlu0 %1122
    %v1124 = vsel %vm50, %v1092, 0.0
    %1125 = vadd.xlane.f32.xlu0 %v1124
    %v1126 = vpop.xlane.xlu0 %1125
    %v1127 = vsel %vm50, %v1093, 0.0
    %1128 = vadd.xlane.f32.xlu0 %v1127
    %v1129 = vpop.xlane.xlu0 %1128
    %v1130 = vld [vmem:[%s5] sm:$0x3]
    %vm1131 = vcmp.gt.f32.partialorder %v1130, 0.5
    %v1144 = vlaneseq
    %v1145 = vand.u32 %v1144, 127
    %v1146 = vlaneseq
    %v1147 = vshrl.u32 %v1146, 7
    %v1148 = vsub.s32 %v1145, %v1147
    %v1149 = vrot.slane %v1096, %v1148
    %v1150 = vlaneseq
    %v1151 = vshrl.u32 %v1150, 7
    %v1152 = vsub.s32 %v1145, %v1151
    %v1153 = vrot.slane %v1099, %v1152
    %v1154 = vlaneseq
    %v1155 = vshrl.u32 %v1154, 7
    %v1156 = vsub.s32 %v1145, %v1155
    %v1157 = vrot.slane %v1102, %v1156
    %v1158 = vlaneseq
    %v1159 = vshrl.u32 %v1158, 7
    %v1160 = vsub.s32 %v1145, %v1159
    %v1161 = vrot.slane %v1105, %v1160
    %v1162 = vlaneseq
    %v1163 = vshrl.u32 %v1162, 7
    %v1164 = vsub.s32 %v1145, %v1163
    %v1165 = vrot.slane %v1108, %v1164
    %v1166 = vlaneseq
    %v1167 = vshrl.u32 %v1166, 7
    %v1168 = vsub.s32 %v1145, %v1167
    %v1169 = vrot.slane %v1111, %v1168
    %v1170 = vlaneseq
    %v1171 = vshrl.u32 %v1170, 7
    %v1172 = vsub.s32 %v1145, %v1171
    %v1173 = vrot.slane %v1114, %v1172
    %v1174 = vlaneseq
    %v1175 = vshrl.u32 %v1174, 7
    %v1176 = vsub.s32 %v1145, %v1175
    %v1177 = vrot.slane %v1117, %v1176
    %v1178 = vlaneseq
    %v1179 = vshrl.u32 %v1178, 7
    %v1180 = vsub.s32 %v1145, %v1179
    %v1181 = vrot.slane %v1120, %v1180
    %v1182 = vlaneseq
    %v1183 = vshrl.u32 %v1182, 7
    %v1184 = vsub.s32 %v1145, %v1183
    %v1185 = vrot.slane %v1123, %v1184
    %v1186 = vlaneseq
    %v1187 = vshrl.u32 %v1186, 7
    %v1188 = vsub.s32 %v1145, %v1187
    %v1189 = vrot.slane %v1126, %v1188
    %v1190 = vlaneseq
    %v1191 = vshrl.u32 %v1190, 7
    %v1192 = vsub.s32 %v1145, %v1191
    %v1193 = vrot.slane %v1129, %v1192
    %vm1194 = vcmask 1041409
    %v1195 = vsel %vm1194, %v1153, %v1149
    %v1196 = vsel %vm1194, %v1161, %v1157
    %v1197 = vsel %vm1194, %v1169, %v1165
    %v1198 = vsel %vm1194, %v1177, %v1173
    %v1199 = vsel %vm1194, %v1185, %v1181
    %v1200 = vsel %vm1194, %v1193, %v1189
    %v1207 = vsel %vm1131, %v1195, -65504.0
    %v1208 = vsel %vm1131, %v1196, -65504.0
    %v1209 = vsel %vm1131, %v1197, -65504.0
    %v1210 = vsel %vm1131, %v1198, -65504.0
    %v1211 = vsel %vm1131, %v1199, -65504.0
    %v1212 = vsel %vm1131, %v1200, -65504.0
    %vm1213 = vcmask 58368
    %v1214 = vsel %vm1213, %v1207, -inf
    %1215 = vmax.xlane.f32.xlu0 %v1214
    %v1216 = vpop.xlane.xlu0 %1215
    %v1217 = vsel %vm1213, %v1208, -inf
    %1218 = vmax.xlane.f32.xlu0 %v1217
    %v1219 = vpop.xlane.xlu0 %1218
    %v1220 = vsel %vm1213, %v1209, -inf
    %1221 = vmax.xlane.f32.xlu0 %v1220
    %v1222 = vpop.xlane.xlu0 %1221
    %v1223 = vsel %vm1213, %v1210, -inf
    %1224 = vmax.xlane.f32.xlu0 %v1223
    %v1225 = vpop.xlane.xlu0 %1224
    %v1226 = vsel %vm1213, %v1211, -inf
    %1227 = vmax.xlane.f32.xlu0 %v1226
    %v1228 = vpop.xlane.xlu0 %1227
    %v1229 = vsel %vm1213, %v1212, -inf
    %1230 = vmax.xlane.f32.xlu0 %v1229
    %v1231 = vpop.xlane.xlu0 %1230
    %v1232 = vsub.f32 %v1207, %v1216
    %v1233 = vsub.f32 %v1208, %v1219
    %v1234 = vsub.f32 %v1209, %v1222
    %v1235 = vsub.f32 %v1210, %v1225
    %v1236 = vsub.f32 %v1211, %v1228
    %v1237 = vsub.f32 %v1212, %v1231
    %v1238 = vmul.f32 %v1232, 1.442695
    %v1239 = vpow.pop %v1238
    %v1240 = vmul.f32 %v1233, 1.442695
    %v1241 = vpow.pop %v1240
    %v1242 = vmul.f32 %v1234, 1.442695
    %v1243 = vpow.pop %v1242
    %v1244 = vmul.f32 %v1235, 1.442695
    %v1245 = vpow.pop %v1244
    %v1246 = vmul.f32 %v1236, 1.442695
    %v1247 = vpow.pop %v1246
    %v1248 = vmul.f32 %v1237, 1.442695
    %v1249 = vpow.pop %v1248
    %v1250 = vsel %vm1213, %v1239, 0.0
    %1251 = vadd.xlane.f32.xlu0 %v1250
    %v1252 = vpop.xlane.xlu0 %1251
    %v1253 = vsel %vm1213, %v1241, 0.0
    %1254 = vadd.xlane.f32.xlu0 %v1253
    %v1255 = vpop.xlane.xlu0 %1254
    %v1256 = vsel %vm1213, %v1243, 0.0
    %1257 = vadd.xlane.f32.xlu0 %v1256
    %v1258 = vpop.xlane.xlu0 %1257
    %v1259 = vsel %vm1213, %v1245, 0.0
    %1260 = vadd.xlane.f32.xlu0 %v1259
    %v1261 = vpop.xlane.xlu0 %1260
    %v1262 = vsel %vm1213, %v1247, 0.0
    %1263 = vadd.xlane.f32.xlu0 %v1262
    %v1264 = vpop.xlane.xlu0 %1263
    %v1265 = vsel %vm1213, %v1249, 0.0
    %1266 = vadd.xlane.f32.xlu0 %v1265
    %v1267 = vpop.xlane.xlu0 %1266
    %v1268 = vrcp.pop %v1252
    %v1269 = vrcp.pop %v1255
    %v1270 = vrcp.pop %v1258
    %v1271 = vrcp.pop %v1261
    %v1272 = vrcp.pop %v1264
    %v1273 = vrcp.pop %v1267
    %v1274 = vmul.f32 %v1239, %v1268
    %v1275 = vmul.f32 %v1241, %v1269
    %v1276 = vmul.f32 %v1243, %v1270
    %v1277 = vmul.f32 %v1245, %v1271
    %v1278 = vmul.f32 %v1247, %v1272
    %v1279 = vmul.f32 %v1249, %v1273
    %v1280 = vcombine.low %v1274, %v1276
    %v1282 = vunpack.c.l.s4 1983009808
    %v1283 = vunpack.c.0.s8 %v1282
    %v1284 = vlaneseq
    %v1285 = vshrl.u32 %v1284, 7
    %v1286 = vsub.s32 %v1283, %v1285
    %v1287 = vrot.slane %v1280, %v1286
    %v1288 = vcombine.low %v1275, %v1277
    %v1290 = vunpack.c.l.s4 1983009808
    %v1291 = vunpack.c.0.s8 %v1290
    %v1292 = vlaneseq
    %v1293 = vshrl.u32 %v1292, 7
    %v1294 = vsub.s32 %v1291, %v1293
    %v1295 = vrot.slane %v1288, %v1294
    %v1296 = vcombine.low %v1287, %v1295
    %v1298 = vunpack.c.l.s4 1934713408
    %v1299 = vunpack.c.0.s8 %v1298
    %v1300 = vlaneseq
    %v1301 = vshrl.u32 %v1300, 7
    %v1302 = vsub.s32 %v1299, %v1301
    %v1303 = vrot.slane %v1296, %v1302
    %v1304 = vcombine.low %v1278, %v1279
    %v1306 = vunpack.c.l.s4 1934713408
    %v1307 = vunpack.c.0.s8 %v1306
    %v1308 = vlaneseq
    %v1309 = vshrl.u32 %v1308, 7
    %v1310 = vsub.s32 %v1307, %v1309
    %v1311 = vrot.slane %v1304, %v1310
    %v1312 = vcombine.low %v1303, %v1311
    %v1313 = vcombine.high %v1303, %v1311
    %vm1314 = vcmask 64512
    %v1316 = vsel %vm1314, %v1312, 0
    %1318 = vmatprep.subr.mxu0 0.0
    %1319 = vmatpush1.msra.mxu0 %v810
    %1320 = vmatprep.subr.mxu0 0.0
    %1321 = vmatpush1.msra.mxu0 0.0
    %1322 = vmatprep.subr.mxu0 0.0
    %1323 = vmatpush1.msra.mxu0 0.0
    %1324 = vmatprep.subr.mxu0 0.0
    %1325 = vmatpush1.msra.mxu0 0.0
    %1326 = vmatprep.subr.mxu0 0.0
    %1327 = vmatpush1.msra.mxu0 0.0
    %1328 = vmatprep.subr.mxu0 0.0
    %1329 = vmatpush1.msra.mxu0 0.0
    %1330 = vmatprep.subr.mxu0 0.0
    %1331 = vmatpush1.msra.mxu0 0.0
    %1332 = vmatprep.subr.mxu0 0.0
    %1333 = vmatpush1.msra.mxu0 0.0
    %1334 = vmatprep.subr.mxu0 0.0
    %1335 = vmatpush1.msra.mxu0 0.0
    %1336 = vmatprep.subr.mxu0 0.0
    %1337 = vmatpush1.msra.mxu0 0.0
    %1338 = vmatprep.subr.mxu0 0.0
    %1339 = vmatpush1.msra.mxu0 0.0
    %1340 = vmatprep.subr.mxu0 0.0
    %1341 = vmatpush1.msra.mxu0 0.0
    %1342 = vmatprep.subr.mxu0 0.0
    %1343 = vmatpush1.msra.mxu0 0.0
    %1344 = vmatprep.subr.mxu0 0.0
    %1345 = vmatpush1.msra.mxu0 0.0
    %1346 = vmatprep.subr.mxu0 0.0
    %1347 = vmatpush1.msra.mxu0 0.0
    %1348 = vmatprep.subr.mxu0 0.0
    %1349 = vmatpush1.msra.mxu0 0.0
    %1350 = vmatprep.subr.mxu0 0.0
    %1351 = vmatpush1.msra.mxu0 0.0
    %1352 = vmatprep.subr.mxu0 0.0
    %1353 = vmatpush1.msra.mxu0 0.0
    %1354 = vmatprep.subr.mxu0 0.0
    %1355 = vmatpush1.msra.mxu0 0.0
    %1356 = vmatprep.subr.mxu0 0.0
    %1357 = vmatpush1.msra.mxu0 0.0
    %1358 = vmatprep.subr.mxu0 0.0
    %1359 = vmatpush1.msra.mxu0 0.0
    %1360 = vmatprep.subr.mxu0 0.0
    %1361 = vmatpush1.msra.mxu0 0.0
    %1362 = vmatprep.subr.mxu0 0.0
    %1363 = vmatpush1.msra.mxu0 0.0
    %1364 = vmatprep.subr.mxu0 0.0
    %1365 = vmatpush1.msra.mxu0 0.0
    %1366 = vmatprep.subr.mxu0 0.0
    %1367 = vmatpush1.msra.mxu0 0.0
    %1368 = vmatprep.subr.mxu0 0.0
    %1369 = vmatpush1.msra.mxu0 0.0
    %1370 = vmatprep.subr.mxu0 0.0
    %1371 = vmatpush1.msra.mxu0 0.0
    %1372 = vmatprep.subr.mxu0 0.0
    %1373 = vmatpush1.msra.mxu0 0.0
    %1374 = vmatprep.subr.mxu0 0.0
    %1375 = vmatpush1.msra.mxu0 0.0
    %1376 = vmatprep.subr.mxu0 0.0
    %1377 = vmatpush1.msra.mxu0 0.0
    %1378 = vmatprep.subr.mxu0 0.0
    %1379 = vmatpush1.msra.mxu0 0.0
    %1380 = vmatprep.subr.mxu0 0.0
    %1381 = vmatpush1.msra.mxu0 0.0
    %1382 = vmatprep.mubr.f32.mxu0 0.0
    %1383 = vmatmul.mubr.f32.gmra.mrb[0].mxu0 %v1316
    %v1384 = vpop.f32.mrb[0].mxu0
    %v1385 = vadd.f32 0.0, %v1384
    %v1386 = vpop.f32.mrb[0].mxu0
    %1387 = vdwg.mxu0
    %v1389 = vsel %vm1314, %v1313, 0
    %1391 = vmatprep.subr.mxu0 0.0
    %1392 = vmatpush1.msra.mxu0 %v811
    %1393 = vmatprep.subr.mxu0 0.0
    %1394 = vmatpush1.msra.mxu0 0.0
    %1395 = vmatprep.subr.mxu0 0.0
    %1396 = vmatpush1.msra.mxu0 0.0
    %1397 = vmatprep.subr.mxu0 0.0
    %1398 = vmatpush1.msra.mxu0 0.0
    %1399 = vmatprep.subr.mxu0 0.0
    %1400 = vmatpush1.msra.mxu0 0.0
    %1401 = vmatprep.subr.mxu0 0.0
    %1402 = vmatpush1.msra.mxu0 0.0
    %1403 = vmatprep.subr.mxu0 0.0
    %1404 = vmatpush1.msra.mxu0 0.0
    %1405 = vmatprep.subr.mxu0 0.0
    %1406 = vmatpush1.msra.mxu0 0.0
    %1407 = vmatprep.subr.mxu0 0.0
    %1408 = vmatpush1.msra.mxu0 0.0
    %1409 = vmatprep.subr.mxu0 0.0
    %1410 = vmatpush1.msra.mxu0 0.0
    %1411 = vmatprep.subr.mxu0 0.0
    %1412 = vmatpush1.msra.mxu0 0.0
    %1413 = vmatprep.subr.mxu0 0.0
    %1414 = vmatpush1.msra.mxu0 0.0
    %1415 = vmatprep.subr.mxu0 0.0
    %1416 = vmatpush1.msra.mxu0 0.0
    %1417 = vmatprep.subr.mxu0 0.0
    %1418 = vmatpush1.msra.mxu0 0.0
    %1419 = vmatprep.subr.mxu0 0.0
    %1420 = vmatpush1.msra.mxu0 0.0
    %1421 = vmatprep.subr.mxu0 0.0
    %1422 = vmatpush1.msra.mxu0 0.0
    %1423 = vmatprep.subr.mxu0 0.0
    %1424 = vmatpush1.msra.mxu0 0.0
    %1425 = vmatprep.subr.mxu0 0.0
    %1426 = vmatpush1.msra.mxu0 0.0
    %1427 = vmatprep.subr.mxu0 0.0
    %1428 = vmatpush1.msra.mxu0 0.0
    %1429 = vmatprep.subr.mxu0 0.0
    %1430 = vmatpush1.msra.mxu0 0.0
    %1431 = vmatprep.subr.mxu0 0.0
    %1432 = vmatpush1.msra.mxu0 0.0
    %1433 = vmatprep.subr.mxu0 0.0
    %1434 = vmatpush1.msra.mxu0 0.0
    %1435 = vmatprep.subr.mxu0 0.0
    %1436 = vmatpush1.msra.mxu0 0.0
    %1437 = vmatprep.subr.mxu0 0.0
    %1438 = vmatpush1.msra.mxu0 0.0
    %1439 = vmatprep.subr.mxu0 0.0
    %1440 = vmatpush1.msra.mxu0 0.0
    %1441 = vmatprep.subr.mxu0 0.0
    %1442 = vmatpush1.msra.mxu0 0.0
    %1443 = vmatprep.subr.mxu0 0.0
    %1444 = vmatpush1.msra.mxu0 0.0
    %1445 = vmatprep.subr.mxu0 0.0
    %1446 = vmatpush1.msra.mxu0 0.0
    %1447 = vmatprep.subr.mxu0 0.0
    %1448 = vmatpush1.msra.mxu0 0.0
    %1449 = vmatprep.subr.mxu0 0.0
    %1450 = vmatpush1.msra.mxu0 0.0
    %1451 = vmatprep.subr.mxu0 0.0
    %1452 = vmatpush1.msra.mxu0 0.0
    %1453 = vmatprep.subr.mxu0 0.0
    %1454 = vmatpush1.msra.mxu0 0.0
    %1455 = vmatprep.mubr.f32.mxu0 0.0
    %1456 = vmatmul.mubr.f32.gmra.mrb[0].mxu0 %v1389
    %v1457 = vpop.f32.mrb[0].mxu0
    %v1458 = vadd.f32 0.0, %v1457
    %v1459 = vpop.f32.mrb[0].mxu0
    %1460 = vdwg.mxu0
    %v1462 = vunpack.c.l.s4 1983009808
    %v1463 = vunpack.c.0.s8 %v1462
    %v1464 = vlaneseq
    %v1465 = vshrl.u32 %v1464, 7
    %v1466 = vsub.s32 %v1463, %v1465
    %v1467 = vrot.slane %v1385, %v1466
    %v1468 = vcombine.high %v1385, 0.0
    %v1470 = vunpack.c.l.s4 1983009808
    %v1471 = vunpack.c.0.s8 %v1470
    %v1472 = vlaneseq
    %v1473 = vshrl.u32 %v1472, 7
    %v1474 = vsub.s32 %v1471, %v1473
    %v1475 = vrot.slane %v1458, %v1474
    %v1476 = vcombine.high %v1458, 0.0
    %v1477 = vcombine.low %v1467, %v1475
    %v1478 = vcombine.high %v1467, %v1475
    %v1480 = vunpack.c.l.s4 1934713408
    %v1481 = vunpack.c.0.s8 %v1480
    %v1482 = vlaneseq
    %v1483 = vshrl.u32 %v1482, 7
    %v1484 = vsub.s32 %v1481, %v1483
    %v1485 = vrot.slane %v1477, %v1484
    %v1487 = vunpack.c.l.s4 1934713408
    %v1488 = vunpack.c.0.s8 %v1487
    %v1489 = vlaneseq
    %v1490 = vshrl.u32 %v1489, 7
    %v1491 = vsub.s32 %v1488, %v1490
    %v1492 = vrot.slane %v1478, %v1491
    %v1493 = vcombine.low %v1468, %v1476
    %v1495 = vunpack.c.l.s4 1934713408
    %v1496 = vunpack.c.0.s8 %v1495
    %v1497 = vlaneseq
    %v1498 = vshrl.u32 %v1497, 7
    %v1499 = vsub.s32 %v1496, %v1498
    %v1500 = vrot.slane %v1493, %v1499
    %v1501 = vcombine.high %v1485, 0.0
    %v1502 = vcombine.high %v1492, 0.0
    %v1503 = vcombine.high %v1500, 0.0
    %v1504 = vsel %vm1314, %v1274, 0.0
    %v1505 = vsel %vm1314, %v1275, 0.0
    %v1506 = vsel %vm1314, %v1276, 0.0
    %v1507 = vsel %vm1314, %v1277, 0.0
    %v1508 = vsel %vm1314, %v1278, 0.0
    %v1509 = vsel %vm1314, %v1279, 0.0
    %1510 = vst [vmem:[#allocation9] sm:$0x3] %v1504
    %1511 = vst [vmem:[#allocation9 + $0x2] sm:$0x3] %v1505
    %1512 = vst [vmem:[#allocation9 + $0x4] sm:$0x3] %v1506
    %1513 = vst [vmem:[#allocation9 + $0x6] sm:$0x3] %v1507
    %1514 = vst [vmem:[#allocation9 + $0x8] sm:$0x3] %v1508
    %1515 = vst [vmem:[#allocation9 + $0xa] sm:$0x3] %v1509
    %v1516 = vsel %vm50, %v1485, 0.0
    %v1517 = vsel %vm50, %v1501, 0.0
    %v1518 = vsel %vm50, %v1492, 0.0
    %v1519 = vsel %vm50, %v1502, 0.0
    %v1520 = vsel %vm50, %v1500, 0.0
    %v1521 = vsel %vm50, %v1503, 0.0
    %1522 = vst [vmem:[#allocation7] sm:$0x3] %v1516
    %1523 = vst [vmem:[#allocation7 + $0x2] sm:$0x3] %v1517
    %1524 = vst [vmem:[#allocation7 + $0x4] sm:$0x3] %v1518
    %1525 = vst [vmem:[#allocation7 + $0x6] sm:$0x3] %v1519
    %1526 = vst [vmem:[#allocation7 + $0x8] sm:$0x3] %v1520
    %1527 = vst [vmem:[#allocation7 + $0xa] sm:$0x3] %v1521
    // Predicated region
    $region42: #{recurrent_attention_forward.1} parent=1 // pred_check
      _
    $region43: #{recurrent_attention_forward.1} parent=1 // pred_check_branch
      %1529 = sbr.rel (0) target = $region45
    $region44: #{recurrent_attention_forward.1} parent=1 // pred_region
      %s1531 = ssub.s32 192, 192
      %1532 = vsyncadd [#allocation3], %s1531
      %s1533 = sshll.u32 [#allocation2], 4
      %s1534 = int_to_ptr.vmem [resolvable:$true] %s1533
      %1539 = dma.vmem_to_hbm [thread:$0]  %s1534, 192, %s10, [#allocation3], 32, 32, 2
    $region45: #{recurrent_attention_forward.1} parent=1 // pred_fallthru
      _
    // Predicated region
    $region46: #{recurrent_attention_forward.1} parent=1 // pred_check
      _
    $region47: #{recurrent_attention_forward.1} parent=1 // pred_check_branch
      %1541 = sbr.rel (0) target = $region49
    $region48: #{recurrent_attention_forward.1} parent=1 // pred_region
      %s1543 = ssub.s32 32, 32
      %1544 = vsyncadd [#allocation5], %s1543
      %s1546 = sshll.u32 [#allocation4], 4
      %s1547 = int_to_ptr.vmem [resolvable:$true] %s1546
      %1549 = dma.vmem_to_hbm [thread:$0]  %s1547, 32, %s11, [#allocation5]
    $region49: #{recurrent_attention_forward.1} parent=1 // pred_fallthru
      _
    // Predicated region
    $region50: #{recurrent_attention_forward.1} parent=1 // pred_check
      _
    $region51: #{recurrent_attention_forward.1} parent=1 // pred_check_branch
      %1551 = sbr.rel (0) target = $region53
    $region52: #{recurrent_attention_forward.1} parent=1 // pred_region
      %s1553 = ssub.s32 32, 32
      %1554 = vsyncadd [#allocation5], %s1553
      %s1556 = sshll.u32 [#allocation6], 4
      %s1557 = int_to_ptr.vmem [resolvable:$true] %s1556
      %1559 = dma.vmem_to_hbm [thread:$0]  %s1557, 32, %s12, [#allocation5]
    $region53: #{recurrent_attention_forward.1} parent=1 // pred_fallthru
      _
    // Predicated region
    $region54: #{recurrent_attention_forward.1} parent=1 // pred_check
      _
    $region55: #{recurrent_attention_forward.1} parent=1 // pred_check_branch
      %1561 = sbr.rel (0) target = $region57
    $region56: #{recurrent_attention_forward.1} parent=1 // pred_region
      %s1563 = ssub.s32 192, 192
      %1564 = vsyncadd [#allocation8], %s1563
      %s1565 = sshll.u32 [#allocation7], 4
      %s1566 = int_to_ptr.vmem [resolvable:$true] %s1565
      %1571 = dma.vmem_to_hbm [thread:$0]  %s1566, 192, %s13, [#allocation8], 32, 32, 2
    $region57: #{recurrent_attention_forward.1} parent=1 // pred_fallthru
      _
    // Predicated region
    $region58: #{recurrent_attention_forward.1} parent=1 // pred_check
      _
    $region59: #{recurrent_attention_forward.1} parent=1 // pred_check_branch
      %1573 = sbr.rel (0) target = $region61
    $region60: #{recurrent_attention_forward.1} parent=1 // pred_region
      %s1575 = ssub.s32 192, 192
      %1576 = vsyncadd [#allocation8], %s1575
      %s1577 = sshll.u32 [#allocation9], 4
      %s1578 = int_to_ptr.vmem [resolvable:$true] %s1577
      %1583 = dma.vmem_to_hbm [thread:$0]  %s1578, 192, %s14, [#allocation8], 32, 32, 2
    $region61: #{recurrent_attention_forward.1} parent=1 // pred_fallthru
      _
    // Predicated region
    $region62: #{recurrent_attention_forward.1} parent=1 // pred_check
      _
    $region63: #{recurrent_attention_forward.1} parent=1 // pred_check_branch
      %1585 = sbr.rel (0) target = $region65
    $region64: #{recurrent_attention_forward.1} parent=1 // pred_region
      %1586 = dma.done [#allocation3], 192
    $region65: #{recurrent_attention_forward.1} parent=1 // pred_fallthru
      _
    // Predicated region
    $region66: #{recurrent_attention_forward.1} parent=1 // pred_check
      _
    $region67: #{recurrent_attention_forward.1} parent=1 // pred_check_branch
      %1588 = sbr.rel (0) target = $region69
    $region68: #{recurrent_attention_forward.1} parent=1 // pred_region
      %1589 = dma.done [#allocation5], 32
    $region69: #{recurrent_attention_forward.1} parent=1 // pred_fallthru
      _
    // Predicated region
    $region70: #{recurrent_attention_forward.1} parent=1 // pred_check
      _
    $region71: #{recurrent_attention_forward.1} parent=1 // pred_check_branch
      %1591 = sbr.rel (0) target = $region73
    $region72: #{recurrent_attention_forward.1} parent=1 // pred_region
      %1592 = dma.done [#allocation5], 32
    $region73: #{recurrent_attention_forward.1} parent=1 // pred_fallthru
      _
    // Predicated region
    $region74: #{recurrent_attention_forward.1} parent=1 // pred_check
      _
    $region75: #{recurrent_attention_forward.1} parent=1 // pred_check_branch
      %1594 = sbr.rel (0) target = $region77
    $region76: #{recurrent_attention_forward.1} parent=1 // pred_region
      %1595 = dma.done [#allocation8], 192
    $region77: #{recurrent_attention_forward.1} parent=1 // pred_fallthru
      _
    // Predicated region
    $region78: #{recurrent_attention_forward.1} parent=1 // pred_check
      _
    $region79: #{recurrent_attention_forward.1} parent=1 // pred_check_branch
      %1597 = sbr.rel (0) target = $region81
    $region80: #{recurrent_attention_forward.1} parent=1 // pred_region
      %1598 = dma.done [#allocation8], 192
    $region81: #{recurrent_attention_forward.1} parent=1 // pred_fallthru
      _
    %1599 = vsyncpa [#allocation3], 1
    %1600 = vsyncpa [#allocation5], 1
    %1601 = vsyncpa [#allocation8], 1

</llo_original>
